<compile_context>
chip_gen: v6e
topology: v6e:2x2x1
jax: 0.10.0
libtpu: 0.0.40
codegen_flags: <defaults>
</compile_context>

<pallas_src>
import jax
import jax.numpy as jnp
from jax import lax
from jax.experimental import pallas as pl
from jax.experimental.pallas import tpu as pltpu


# ----------------------------------------------------------------------------
# Pallas kernel: fused embedding lookup + bidirectional GRU + fc/tanh head.
# Single grid point; all operands live in VMEM.
# ----------------------------------------------------------------------------
def _encoder_gru_kernel(
    tok_f_ref,   # (S*Bp, 1) int32  token ids, forward time order (batch padded)
    tok_b_ref,   # (S*Bp, 1) int32  token ids, reversed time order
    wf_ref,      # (Vp, 6H) f32     (emb @ W_ih_fwd) in columns [r_f|0|z_f|0|n_f|0]
    wb_ref,      # (Vp, 6H) f32     (emb @ W_ih_bwd) in columns [0|r_b|0|z_b|0|n_b]
    bih_ref,     # (1, 6H)  f32     b_ih interleaved, with r/z parts of b_hh folded in
    whh_ref,     # (2H, 6H) f32     block-diagonal recurrent weights, same column order
    bhhn_ref,    # (1, 2H)  f32     n-gate b_hh, [n_f | n_b]
    wfc_ref,     # (2H, D)  f32
    bfc_ref,     # (1, D)   f32
    out_ref,     # (S*Bp, 2H) f32   per-step hidden, [fwd | bwd], time-major
    hid_ref,     # (Bp, D)  f32     tanh(fc([h_fwd_final | h_bwd_final]))
):
    SB, H2 = out_ref.shape
    H = H2 // 2
    Bp, _ = hid_ref.shape
    S = SB // Bp
    Vp = wf_ref.shape[0]

    # ---- fused embedding lookup + input projection (both directions, all steps) ----
    # one-hot(token) @ (emb @ W_ih)  ==  W_ih(emb[token]);  one big batched matmul,
    # off the serial recurrence chain.
    iota_v = lax.broadcasted_iota(jnp.int32, (SB, Vp), 1)
    onehot_f = (iota_v == tok_f_ref[...]).astype(jnp.float32)       # (SB, Vp)
    onehot_b = (iota_v == tok_b_ref[...]).astype(jnp.float32)       # (SB, Vp)
    gi_all = (
        jnp.dot(onehot_f, wf_ref[...], preferred_element_type=jnp.float32)
        + jnp.dot(onehot_b, wb_ref[...], preferred_element_type=jnp.float32)
        + bih_ref[...]
    )                                                               # (SB, 6H)

    # Hoist loop-invariant recurrent weights / n-gate bias.
    whh = whh_ref[...]          # (2H, 6H)
    bhhn = bhhn_ref[...]        # (1, 2H)

    # ---- fused fwd+bwd recurrence; combined state h = [h_fwd | h_bwd]  (Bp, 2H) ----
    h = jnp.zeros((Bp, 2 * H), jnp.float32)
    outs_f = []
    outs_b = []
    for i in range(S):  # S static -> fully unrolled, all slices static & tile-aligned
        gi = gi_all[i * Bp:(i + 1) * Bp, :]                                  # (Bp, 6H)
        gh = jnp.dot(h, whh, preferred_element_type=jnp.float32)             # (Bp, 6H)

        # PyTorch GRU math, both directions at once (gate order [r, z, n]):
        rz = jax.nn.sigmoid(gi[:, : 4 * H] + gh[:, : 4 * H])
        r = rz[:, : 2 * H]
        z = rz[:, 2 * H:]
        n = jnp.tanh(gi[:, 4 * H:] + r * (gh[:, 4 * H:] + bhhn))
        h = (1.0 - z) * n + z * h

        outs_f.append(h[:, :H])   # forward hidden for time i
        outs_b.append(h[:, H:])   # backward hidden for time S-1-i

    # ---- bulk epilogue stores (no per-step masked partial stores) ----
    out_f = jnp.concatenate(outs_f, axis=0)          # (SB, H)  time order
    out_b = jnp.concatenate(outs_b[::-1], axis=0)    # (SB, H)  time order
    out_ref[...] = jnp.concatenate([out_f, out_b], axis=1)

    # decoder-init hidden: final combined state is already cat(h_fwd, h_bwd).
    hid_ref[...] = jnp.tanh(
        jnp.dot(h, wfc_ref[...], preferred_element_type=jnp.float32) + bfc_ref[...]
    )


# ----------------------------------------------------------------------------
# Trace-time weight re-packing (gate-major, direction-minor column order).
# ----------------------------------------------------------------------------
def _block_gate_weights(wf, wb):
    """(Din, 3H) fwd/bwd weights -> (2*Din, 6H) block-diagonal weights.

    Columns ordered [r_f | r_b | z_f | z_b | n_f | n_b]; forward columns read only
    the first Din rows, backward columns only the last Din rows.
    """
    din, h3 = wf.shape
    H = h3 // 3
    z = jnp.zeros((din, H), wf.dtype)
    top = jnp.concatenate(
        [wf[:, 0:H], z, wf[:, H:2 * H], z, wf[:, 2 * H:], z], axis=1)
    bot = jnp.concatenate(
        [z, wb[:, 0:H], z, wb[:, H:2 * H], z, wb[:, 2 * H:]], axis=1)
    return jnp.concatenate([top, bot], axis=0)


def _expand_cols(w3, fwd):
    """(Vp, 3H) per-direction weights -> (Vp, 6H) with zeros in the other direction's cols."""
    vp, h3 = w3.shape
    H = h3 // 3
    z = jnp.zeros((vp, H), w3.dtype)
    if fwd:
        cols = [w3[:, 0:H], z, w3[:, H:2 * H], z, w3[:, 2 * H:], z]
    else:
        cols = [z, w3[:, 0:H], z, w3[:, H:2 * H], z, w3[:, 2 * H:]]
    return jnp.concatenate(cols, axis=1)


def _interleave_bias(bf, bb):
    H = bf.shape[1] // 3
    return jnp.concatenate(
        [bf[:, 0:H], bb[:, 0:H], bf[:, H:2 * H], bb[:, H:2 * H],
         bf[:, 2 * H:], bb[:, 2 * H:]], axis=1)


# ----------------------------------------------------------------------------
# Wrapper
# ----------------------------------------------------------------------------
def encoder_forward(src, params):
    """src: (S, B) int32 token ids.  Returns (outputs (S,B,2H), hidden (B,D))."""
    S, B = src.shape
    V, E = params["emb"].shape
    H = params["whh_f"].shape[0]
    D = params["wfc"].shape[1]

    Bp = ((B + 7) // 8) * 8           # pad batch to the 8-sublane tile
    Vp = ((V + 127) // 128) * 128     # pad vocab to a lane-dense multiple of 128

    # Tiny int32 token inputs: forward order + time-reversed order (backward direction).
    # Padded batch rows get token 0 (their results are computed but never returned).
    src_pad = jnp.zeros((S, Bp), jnp.int32).at[:, :B].set(src.astype(jnp.int32))
    tok_f = src_pad.reshape(S * Bp, 1)
    tok_b = src_pad[::-1].reshape(S * Bp, 1)

    # Fold embedding into the GRU input projection: row v of (emb @ W_ih) is the
    # input projection for token v.  Dropout is identity in eval mode.
    # TODO(synk): training-mode dropout (random mask on the embedded vectors) not applied.
    emb_pad = jnp.zeros((Vp, E), jnp.float32).at[:V, :].set(
        params["emb"].astype(jnp.float32))
    wf6 = _expand_cols(emb_pad @ params["wih_f"], fwd=True)     # (Vp, 6H)
    wb6 = _expand_cols(emb_pad @ params["wih_b"], fwd=False)    # (Vp, 6H)

    # Bias: interleave b_ih; fold the r/z parts of b_hh into it (exact: addition commutes);
    # keep the n-gate b_hh separate (it sits inside r * (gh_n + bhh_n) in PyTorch).
    bih6 = _interleave_bias(params["bih_f"], params["bih_b"])
    bhh6 = _interleave_bias(params["bhh_f"], params["bhh_b"])
    bih6 = bih6.at[:, : 4 * H].add(bhh6[:, : 4 * H])
    bhhn = bhh6[:, 4 * H:]                                      # (1, 2H)

    whh6 = _block_gate_weights(params["whh_f"], params["whh_b"])  # (2H, 6H)

    inputs = (tok_f, tok_b, wf6, wb6, bih6, whh6, bhhn,
              params["wfc"], params["bfc"])
    vmem = pl.BlockSpec(memory_space=pltpu.MemorySpace.VMEM)

    out2d, hid_p = pl.pallas_call(
        _encoder_gru_kernel,
        out_shape=(
            jax.ShapeDtypeStruct((S * Bp, 2 * H), jnp.float32),
            jax.ShapeDtypeStruct((Bp, D), jnp.float32),
        ),
        in_specs=[vmem] * len(inputs),
        out_specs=(vmem, vmem),
    )(*inputs)

    outputs = out2d.reshape(S, Bp, 2 * H)[:, :B, :]   # drop padded batch rows
    hidden = hid_p[:B, :]
    return outputs, hidden


# ----------------------------------------------------------------------------
# Pure-JAX reference (for correctness check)
# ----------------------------------------------------------------------------
def encoder_reference(src, params):
    emb = jnp.take(params["emb"], src, axis=0).astype(jnp.float32)
    S, B, E = emb.shape
    H = params["whh_f"].shape[0]

    def make_cell(wih, whh, bih, bhh):
        def cell(h, x_t):
            gi = x_t @ wih + bih
            gh = h @ whh + bhh
            r = jax.nn.sigmoid(gi[:, :H] + gh[:, :H])
            z = jax.nn.sigmoid(gi[:, H:2 * H] + gh[:, H:2 * H])
            n = jnp.tanh(gi[:, 2 * H:] + r * gh[:, 2 * H:])
            h_new = (1.0 - z) * n + z * h
            return h_new, h_new
        return cell

    h0 = jnp.zeros((B, H), jnp.float32)
    h_f, out_f = lax.scan(
        make_cell(params["wih_f"], params["whh_f"],
                  params["bih_f"][0], params["bhh_f"][0]), h0, emb)
    h_b, out_b_rev = lax.scan(
        make_cell(params["wih_b"], params["whh_b"],
                  params["bih_b"][0], params["bhh_b"][0]), h0, emb[::-1])
    out_b = out_b_rev[::-1]
    outputs = jnp.concatenate([out_f, out_b], axis=-1)
    h_cat = jnp.concatenate([h_f, h_b], axis=1)
    hidden = jnp.tanh(h_cat @ params["wfc"] + params["bfc"][0])
    return outputs, hidden


# ----------------------------------------------------------------------------
# Deterministic parameter construction (shapes per the module's __init__)
# ----------------------------------------------------------------------------
def make_params(key, in_sz, emb_sz, enc_hid_dim, dec_hid_dim):
    ks = jax.random.split(key, 11)
    s = 0.1
    H, E, D = enc_hid_dim, emb_sz, dec_hid_dim
    return {
        "emb":   s * jax.random.normal(ks[0], (in_sz, E), jnp.float32),
        # GRU weights stored transposed vs. PyTorch: (in_features, 3H), gate order [r,z,n]
        "wih_f": s * jax.random.normal(ks[1], (E, 3 * H), jnp.float32),
        "whh_f": s * jax.random.normal(ks[2], (H, 3 * H), jnp.float32),
        "bih_f": s * jax.random.normal(ks[3], (1, 3 * H), jnp.float32),
        "bhh_f": s * jax.random.normal(ks[4], (1, 3 * H), jnp.float32),
        "wih_b": s * jax.random.normal(ks[5], (E, 3 * H), jnp.float32),
        "whh_b": s * jax.random.normal(ks[6], (H, 3 * H), jnp.float32),
        "bih_b": s * jax.random.normal(ks[7], (1, 3 * H), jnp.float32),
        "bhh_b": s * jax.random.normal(ks[8], (1, 3 * H), jnp.float32),
        "wfc":   s * jax.random.normal(ks[9], (2 * H, D), jnp.float32),
        "bfc":   s * jax.random.normal(ks[10], (1, D), jnp.float32),
    }


if __name__ == "__main__":
    # config: in_sz (vocab)=50, emb_sz=16, enc_hid_dim=32, dec_hid_dim=32, dropout=0.1(eval)
    IN_SZ, EMB, ENC_H, DEC_H = 50, 16, 32, 32
    SEQ, BATCH = 8, 4

    key = jax.random.PRNGKey(0)
    k_par, k_src = jax.random.split(key)
    params = make_params(k_par, IN_SZ, EMB, ENC_H, DEC_H)
    src = jax.random.randint(k_src, (SEQ, BATCH), 0, IN_SZ, dtype=jnp.int32)

    outputs, hidden = jax.jit(encoder_forward)(src, params)
    jax.block_until_ready((outputs, hidden))

    ref_out, ref_hid = jax.jit(encoder_reference)(src, params)
    assert outputs.shape == (SEQ, BATCH, 2 * ENC_H)
    assert hidden.shape == (BATCH, DEC_H)
    assert jnp.allclose(outputs, ref_out, atol=2e-5, rtol=1e-5)
    assert jnp.allclose(hidden, ref_hid, atol=2e-5, rtol=1e-5)

    print("KERNEL_OK")
</pallas_src>

<mosaic_0001>
module attributes {stable_mosaic.version = 11 : i64} {
  func.func @_encoder_gru_kernel(%arg0: memref<64x1xi32, #tpu.memory_space<vmem>>, %arg1: memref<64x1xi32, #tpu.memory_space<vmem>>, %arg2: memref<128x192xf32, #tpu.memory_space<vmem>>, %arg3: memref<128x192xf32, #tpu.memory_space<vmem>>, %arg4: memref<1x192xf32, #tpu.memory_space<vmem>>, %arg5: memref<64x192xf32, #tpu.memory_space<vmem>>, %arg6: memref<1x64xf32, #tpu.memory_space<vmem>>, %arg7: memref<64x32xf32, #tpu.memory_space<vmem>>, %arg8: memref<1x32xf32, #tpu.memory_space<vmem>>, %arg9: memref<64x64xf32, #tpu.memory_space<vmem>>, %arg10: memref<8x32xf32, #tpu.memory_space<vmem>>) attributes {dimension_semantics = [], scalar_prefetch = 0 : i64, scratch_operands = 0 : i64, tpu.core_type = #tpu.core_type<tc>} {
    %0 = tpu.iota {dimensions = array<i32: 1>} : vector<64x128xi32>
    %c0 = arith.constant 0 : index
    %c0_0 = arith.constant 0 : index
    %1 = vector.load %arg0[%c0, %c0_0] : memref<64x1xi32, #tpu.memory_space<vmem>>, vector<64x1xi32>
    %2 = vector.broadcast %1 : vector<64x1xi32> to vector<64x128xi32>
    %3 = arith.cmpi eq, %0, %2 : vector<64x128xi32>
    %4 = arith.extui %3 : vector<64x128xi1> to vector<64x128xi32>
    %5 = arith.sitofp %4 : vector<64x128xi32> to vector<64x128xf32>
    %c0_1 = arith.constant 0 : index
    %c0_2 = arith.constant 0 : index
    %6 = vector.load %arg1[%c0_1, %c0_2] : memref<64x1xi32, #tpu.memory_space<vmem>>, vector<64x1xi32>
    %7 = vector.broadcast %6 : vector<64x1xi32> to vector<64x128xi32>
    %8 = arith.cmpi eq, %0, %7 : vector<64x128xi32>
    %9 = arith.extui %8 : vector<64x128xi1> to vector<64x128xi32>
    %10 = arith.sitofp %9 : vector<64x128xi32> to vector<64x128xf32>
    %c0_3 = arith.constant 0 : index
    %c0_4 = arith.constant 0 : index
    %11 = vector.load %arg2[%c0_3, %c0_4] : memref<128x192xf32, #tpu.memory_space<vmem>>, vector<128x192xf32>
    %cst = arith.constant dense<0.000000e+00> : vector<64x192xf32>
    %12 = tpu.matmul %5, %11, %cst {dimension_numbers = #tpu.dot_dimension_numbers<[1], [0], [0], [1], [0, 0, 1, 1], [], []>} : vector<64x128xf32>, vector<128x192xf32>, vector<64x192xf32> -> vector<64x192xf32>
    %c0_5 = arith.constant 0 : index
    %c0_6 = arith.constant 0 : index
    %13 = vector.load %arg3[%c0_5, %c0_6] : memref<128x192xf32, #tpu.memory_space<vmem>>, vector<128x192xf32>
    %cst_7 = arith.constant dense<0.000000e+00> : vector<64x192xf32>
    %14 = tpu.matmul %10, %13, %cst_7 {dimension_numbers = #tpu.dot_dimension_numbers<[1], [0], [0], [1], [0, 0, 1, 1], [], []>} : vector<64x128xf32>, vector<128x192xf32>, vector<64x192xf32> -> vector<64x192xf32>
    %15 = arith.addf %12, %14 : vector<64x192xf32>
    %c0_8 = arith.constant 0 : index
    %c0_9 = arith.constant 0 : index
    %16 = vector.load %arg4[%c0_8, %c0_9] : memref<1x192xf32, #tpu.memory_space<vmem>>, vector<1x192xf32>
    %17 = vector.broadcast %16 : vector<1x192xf32> to vector<64x192xf32>
    %18 = arith.addf %15, %17 : vector<64x192xf32>
    %c0_10 = arith.constant 0 : index
    %c0_11 = arith.constant 0 : index
    %19 = vector.load %arg5[%c0_10, %c0_11] : memref<64x192xf32, #tpu.memory_space<vmem>>, vector<64x192xf32>
    %c0_12 = arith.constant 0 : index
    %c0_13 = arith.constant 0 : index
    %20 = vector.load %arg6[%c0_12, %c0_13] : memref<1x64xf32, #tpu.memory_space<vmem>>, vector<1x64xf32>
    %cst_14 = arith.constant 0.000000e+00 : f32
    %21 = vector.broadcast %cst_14 : f32 to vector<8x64xf32>
    %22 = vector.extract_strided_slice %18 {offsets = [0, 0], sizes = [8, 192], strides = [1, 1]} : vector<64x192xf32> to vector<8x192xf32>
    %cst_15 = arith.constant dense<0.000000e+00> : vector<8x192xf32>
    %23 = tpu.matmul %21, %19, %cst_15 {dimension_numbers = #tpu.dot_dimension_numbers<[1], [0], [0], [1], [0, 0, 1, 1], [], []>} : vector<8x64xf32>, vector<64x192xf32>, vector<8x192xf32> -> vector<8x192xf32>
    %24 = vector.extract_strided_slice %22 {offsets = [0, 0], sizes = [8, 128], strides = [1, 1]} : vector<8x192xf32> to vector<8x128xf32>
    %25 = vector.extract_strided_slice %23 {offsets = [0, 0], sizes = [8, 128], strides = [1, 1]} : vector<8x192xf32> to vector<8x128xf32>
    %26 = arith.addf %24, %25 : vector<8x128xf32>
    %27 = arith.negf %26 : vector<8x128xf32>
    %28 = math.exp %27 : vector<8x128xf32>
    %cst_16 = arith.constant 1.000000e+00 : f32
    %29 = vector.broadcast %cst_16 : f32 to vector<8x128xf32>
    %30 = arith.addf %29, %28 : vector<8x128xf32>
    %31 = arith.divf %29, %30 : vector<8x128xf32>
    %32 = vector.extract_strided_slice %31 {offsets = [0, 0], sizes = [8, 64], strides = [1, 1]} : vector<8x128xf32> to vector<8x64xf32>
    %33 = vector.extract_strided_slice %31 {offsets = [0, 64], sizes = [8, 64], strides = [1, 1]} : vector<8x128xf32> to vector<8x64xf32>
    %34 = vector.extract_strided_slice %22 {offsets = [0, 128], sizes = [8, 64], strides = [1, 1]} : vector<8x192xf32> to vector<8x64xf32>
    %35 = vector.extract_strided_slice %23 {offsets = [0, 128], sizes = [8, 64], strides = [1, 1]} : vector<8x192xf32> to vector<8x64xf32>
    %36 = vector.broadcast %20 : vector<1x64xf32> to vector<8x64xf32>
    %37 = arith.addf %35, %36 : vector<8x64xf32>
    %38 = arith.mulf %32, %37 : vector<8x64xf32>
    %39 = arith.addf %34, %38 : vector<8x64xf32>
    %40 = math.tanh %39 : vector<8x64xf32>
    %cst_17 = arith.constant 1.000000e+00 : f32
    %41 = vector.broadcast %cst_17 : f32 to vector<8x64xf32>
    %42 = arith.subf %41, %33 : vector<8x64xf32>
    %43 = arith.mulf %42, %40 : vector<8x64xf32>
    %44 = arith.mulf %33, %21 : vector<8x64xf32>
    %45 = arith.addf %43, %44 : vector<8x64xf32>
    %46 = vector.extract_strided_slice %45 {offsets = [0, 0], sizes = [8, 32], strides = [1, 1]} : vector<8x64xf32> to vector<8x32xf32>
    %47 = vector.extract_strided_slice %45 {offsets = [0, 32], sizes = [8, 32], strides = [1, 1]} : vector<8x64xf32> to vector<8x32xf32>
    %48 = vector.extract_strided_slice %18 {offsets = [8, 0], sizes = [8, 192], strides = [1, 1]} : vector<64x192xf32> to vector<8x192xf32>
    %cst_18 = arith.constant dense<0.000000e+00> : vector<8x192xf32>
    %49 = tpu.matmul %45, %19, %cst_18 {dimension_numbers = #tpu.dot_dimension_numbers<[1], [0], [0], [1], [0, 0, 1, 1], [], []>} : vector<8x64xf32>, vector<64x192xf32>, vector<8x192xf32> -> vector<8x192xf32>
    %50 = vector.extract_strided_slice %48 {offsets = [0, 0], sizes = [8, 128], strides = [1, 1]} : vector<8x192xf32> to vector<8x128xf32>
    %51 = vector.extract_strided_slice %49 {offsets = [0, 0], sizes = [8, 128], strides = [1, 1]} : vector<8x192xf32> to vector<8x128xf32>
    %52 = arith.addf %50, %51 : vector<8x128xf32>
    %53 = arith.negf %52 : vector<8x128xf32>
    %54 = math.exp %53 : vector<8x128xf32>
    %cst_19 = arith.constant 1.000000e+00 : f32
    %55 = vector.broadcast %cst_19 : f32 to vector<8x128xf32>
    %56 = arith.addf %55, %54 : vector<8x128xf32>
    %57 = arith.divf %55, %56 : vector<8x128xf32>
    %58 = vector.extract_strided_slice %57 {offsets = [0, 0], sizes = [8, 64], strides = [1, 1]} : vector<8x128xf32> to vector<8x64xf32>
    %59 = vector.extract_strided_slice %57 {offsets = [0, 64], sizes = [8, 64], strides = [1, 1]} : vector<8x128xf32> to vector<8x64xf32>
    %60 = vector.extract_strided_slice %48 {offsets = [0, 128], sizes = [8, 64], strides = [1, 1]} : vector<8x192xf32> to vector<8x64xf32>
    %61 = vector.extract_strided_slice %49 {offsets = [0, 128], sizes = [8, 64], strides = [1, 1]} : vector<8x192xf32> to vector<8x64xf32>
    %62 = vector.broadcast %20 : vector<1x64xf32> to vector<8x64xf32>
    %63 = arith.addf %61, %62 : vector<8x64xf32>
    %64 = arith.mulf %58, %63 : vector<8x64xf32>
    %65 = arith.addf %60, %64 : vector<8x64xf32>
    %66 = math.tanh %65 : vector<8x64xf32>
    %cst_20 = arith.constant 1.000000e+00 : f32
    %67 = vector.broadcast %cst_20 : f32 to vector<8x64xf32>
    %68 = arith.subf %67, %59 : vector<8x64xf32>
    %69 = arith.mulf %68, %66 : vector<8x64xf32>
    %70 = arith.mulf %59, %45 : vector<8x64xf32>
    %71 = arith.addf %69, %70 : vector<8x64xf32>
    %72 = vector.extract_strided_slice %71 {offsets = [0, 0], sizes = [8, 32], strides = [1, 1]} : vector<8x64xf32> to vector<8x32xf32>
    %73 = vector.extract_strided_slice %71 {offsets = [0, 32], sizes = [8, 32], strides = [1, 1]} : vector<8x64xf32> to vector<8x32xf32>
    %74 = vector.extract_strided_slice %18 {offsets = [16, 0], sizes = [8, 192], strides = [1, 1]} : vector<64x192xf32> to vector<8x192xf32>
    %cst_21 = arith.constant dense<0.000000e+00> : vector<8x192xf32>
    %75 = tpu.matmul %71, %19, %cst_21 {dimension_numbers = #tpu.dot_dimension_numbers<[1], [0], [0], [1], [0, 0, 1, 1], [], []>} : vector<8x64xf32>, vector<64x192xf32>, vector<8x192xf32> -> vector<8x192xf32>
    %76 = vector.extract_strided_slice %74 {offsets = [0, 0], sizes = [8, 128], strides = [1, 1]} : vector<8x192xf32> to vector<8x128xf32>
    %77 = vector.extract_strided_slice %75 {offsets = [0, 0], sizes = [8, 128], strides = [1, 1]} : vector<8x192xf32> to vector<8x128xf32>
    %78 = arith.addf %76, %77 : vector<8x128xf32>
    %79 = arith.negf %78 : vector<8x128xf32>
    %80 = math.exp %79 : vector<8x128xf32>
    %cst_22 = arith.constant 1.000000e+00 : f32
    %81 = vector.broadcast %cst_22 : f32 to vector<8x128xf32>
    %82 = arith.addf %81, %80 : vector<8x128xf32>
    %83 = arith.divf %81, %82 : vector<8x128xf32>
    %84 = vector.extract_strided_slice %83 {offsets = [0, 0], sizes = [8, 64], strides = [1, 1]} : vector<8x128xf32> to vector<8x64xf32>
    %85 = vector.extract_strided_slice %83 {offsets = [0, 64], sizes = [8, 64], strides = [1, 1]} : vector<8x128xf32> to vector<8x64xf32>
    %86 = vector.extract_strided_slice %74 {offsets = [0, 128], sizes = [8, 64], strides = [1, 1]} : vector<8x192xf32> to vector<8x64xf32>
    %87 = vector.extract_strided_slice %75 {offsets = [0, 128], sizes = [8, 64], strides = [1, 1]} : vector<8x192xf32> to vector<8x64xf32>
    %88 = vector.broadcast %20 : vector<1x64xf32> to vector<8x64xf32>
    %89 = arith.addf %87, %88 : vector<8x64xf32>
    %90 = arith.mulf %84, %89 : vector<8x64xf32>
    %91 = arith.addf %86, %90 : vector<8x64xf32>
    %92 = math.tanh %91 : vector<8x64xf32>
    %cst_23 = arith.constant 1.000000e+00 : f32
    %93 = vector.broadcast %cst_23 : f32 to vector<8x64xf32>
    %94 = arith.subf %93, %85 : vector<8x64xf32>
    %95 = arith.mulf %94, %92 : vector<8x64xf32>
    %96 = arith.mulf %85, %71 : vector<8x64xf32>
    %97 = arith.addf %95, %96 : vector<8x64xf32>
    %98 = vector.extract_strided_slice %97 {offsets = [0, 0], sizes = [8, 32], strides = [1, 1]} : vector<8x64xf32> to vector<8x32xf32>
    %99 = vector.extract_strided_slice %97 {offsets = [0, 32], sizes = [8, 32], strides = [1, 1]} : vector<8x64xf32> to vector<8x32xf32>
    %100 = vector.extract_strided_slice %18 {offsets = [24, 0], sizes = [8, 192], strides = [1, 1]} : vector<64x192xf32> to vector<8x192xf32>
    %cst_24 = arith.constant dense<0.000000e+00> : vector<8x192xf32>
    %101 = tpu.matmul %97, %19, %cst_24 {dimension_numbers = #tpu.dot_dimension_numbers<[1], [0], [0], [1], [0, 0, 1, 1], [], []>} : vector<8x64xf32>, vector<64x192xf32>, vector<8x192xf32> -> vector<8x192xf32>
    %102 = vector.extract_strided_slice %100 {offsets = [0, 0], sizes = [8, 128], strides = [1, 1]} : vector<8x192xf32> to vector<8x128xf32>
    %103 = vector.extract_strided_slice %101 {offsets = [0, 0], sizes = [8, 128], strides = [1, 1]} : vector<8x192xf32> to vector<8x128xf32>
    %104 = arith.addf %102, %103 : vector<8x128xf32>
    %105 = arith.negf %104 : vector<8x128xf32>
    %106 = math.exp %105 : vector<8x128xf32>
    %cst_25 = arith.constant 1.000000e+00 : f32
    %107 = vector.broadcast %cst_25 : f32 to vector<8x128xf32>
    %108 = arith.addf %107, %106 : vector<8x128xf32>
    %109 = arith.divf %107, %108 : vector<8x128xf32>
    %110 = vector.extract_strided_slice %109 {offsets = [0, 0], sizes = [8, 64], strides = [1, 1]} : vector<8x128xf32> to vector<8x64xf32>
    %111 = vector.extract_strided_slice %109 {offsets = [0, 64], sizes = [8, 64], strides = [1, 1]} : vector<8x128xf32> to vector<8x64xf32>
    %112 = vector.extract_strided_slice %100 {offsets = [0, 128], sizes = [8, 64], strides = [1, 1]} : vector<8x192xf32> to vector<8x64xf32>
    %113 = vector.extract_strided_slice %101 {offsets = [0, 128], sizes = [8, 64], strides = [1, 1]} : vector<8x192xf32> to vector<8x64xf32>
    %114 = vector.broadcast %20 : vector<1x64xf32> to vector<8x64xf32>
    %115 = arith.addf %113, %114 : vector<8x64xf32>
    %116 = arith.mulf %110, %115 : vector<8x64xf32>
    %117 = arith.addf %112, %116 : vector<8x64xf32>
    %118 = math.tanh %117 : vector<8x64xf32>
    %cst_26 = arith.constant 1.000000e+00 : f32
    %119 = vector.broadcast %cst_26 : f32 to vector<8x64xf32>
    %120 = arith.subf %119, %111 : vector<8x64xf32>
    %121 = arith.mulf %120, %118 : vector<8x64xf32>
    %122 = arith.mulf %111, %97 : vector<8x64xf32>
    %123 = arith.addf %121, %122 : vector<8x64xf32>
    %124 = vector.extract_strided_slice %123 {offsets = [0, 0], sizes = [8, 32], strides = [1, 1]} : vector<8x64xf32> to vector<8x32xf32>
    %125 = vector.extract_strided_slice %123 {offsets = [0, 32], sizes = [8, 32], strides = [1, 1]} : vector<8x64xf32> to vector<8x32xf32>
    %126 = vector.extract_strided_slice %18 {offsets = [32, 0], sizes = [8, 192], strides = [1, 1]} : vector<64x192xf32> to vector<8x192xf32>
    %cst_27 = arith.constant dense<0.000000e+00> : vector<8x192xf32>
    %127 = tpu.matmul %123, %19, %cst_27 {dimension_numbers = #tpu.dot_dimension_numbers<[1], [0], [0], [1], [0, 0, 1, 1], [], []>} : vector<8x64xf32>, vector<64x192xf32>, vector<8x192xf32> -> vector<8x192xf32>
    %128 = vector.extract_strided_slice %126 {offsets = [0, 0], sizes = [8, 128], strides = [1, 1]} : vector<8x192xf32> to vector<8x128xf32>
    %129 = vector.extract_strided_slice %127 {offsets = [0, 0], sizes = [8, 128], strides = [1, 1]} : vector<8x192xf32> to vector<8x128xf32>
    %130 = arith.addf %128, %129 : vector<8x128xf32>
    %131 = arith.negf %130 : vector<8x128xf32>
    %132 = math.exp %131 : vector<8x128xf32>
    %cst_28 = arith.constant 1.000000e+00 : f32
    %133 = vector.broadcast %cst_28 : f32 to vector<8x128xf32>
    %134 = arith.addf %133, %132 : vector<8x128xf32>
    %135 = arith.divf %133, %134 : vector<8x128xf32>
    %136 = vector.extract_strided_slice %135 {offsets = [0, 0], sizes = [8, 64], strides = [1, 1]} : vector<8x128xf32> to vector<8x64xf32>
    %137 = vector.extract_strided_slice %135 {offsets = [0, 64], sizes = [8, 64], strides = [1, 1]} : vector<8x128xf32> to vector<8x64xf32>
    %138 = vector.extract_strided_slice %126 {offsets = [0, 128], sizes = [8, 64], strides = [1, 1]} : vector<8x192xf32> to vector<8x64xf32>
    %139 = vector.extract_strided_slice %127 {offsets = [0, 128], sizes = [8, 64], strides = [1, 1]} : vector<8x192xf32> to vector<8x64xf32>
    %140 = vector.broadcast %20 : vector<1x64xf32> to vector<8x64xf32>
    %141 = arith.addf %139, %140 : vector<8x64xf32>
    %142 = arith.mulf %136, %141 : vector<8x64xf32>
    %143 = arith.addf %138, %142 : vector<8x64xf32>
    %144 = math.tanh %143 : vector<8x64xf32>
    %cst_29 = arith.constant 1.000000e+00 : f32
    %145 = vector.broadcast %cst_29 : f32 to vector<8x64xf32>
    %146 = arith.subf %145, %137 : vector<8x64xf32>
    %147 = arith.mulf %146, %144 : vector<8x64xf32>
    %148 = arith.mulf %137, %123 : vector<8x64xf32>
    %149 = arith.addf %147, %148 : vector<8x64xf32>
    %150 = vector.extract_strided_slice %149 {offsets = [0, 0], sizes = [8, 32], strides = [1, 1]} : vector<8x64xf32> to vector<8x32xf32>
    %151 = vector.extract_strided_slice %149 {offsets = [0, 32], sizes = [8, 32], strides = [1, 1]} : vector<8x64xf32> to vector<8x32xf32>
    %152 = vector.extract_strided_slice %18 {offsets = [40, 0], sizes = [8, 192], strides = [1, 1]} : vector<64x192xf32> to vector<8x192xf32>
    %cst_30 = arith.constant dense<0.000000e+00> : vector<8x192xf32>
    %153 = tpu.matmul %149, %19, %cst_30 {dimension_numbers = #tpu.dot_dimension_numbers<[1], [0], [0], [1], [0, 0, 1, 1], [], []>} : vector<8x64xf32>, vector<64x192xf32>, vector<8x192xf32> -> vector<8x192xf32>
    %154 = vector.extract_strided_slice %152 {offsets = [0, 0], sizes = [8, 128], strides = [1, 1]} : vector<8x192xf32> to vector<8x128xf32>
    %155 = vector.extract_strided_slice %153 {offsets = [0, 0], sizes = [8, 128], strides = [1, 1]} : vector<8x192xf32> to vector<8x128xf32>
    %156 = arith.addf %154, %155 : vector<8x128xf32>
    %157 = arith.negf %156 : vector<8x128xf32>
    %158 = math.exp %157 : vector<8x128xf32>
    %cst_31 = arith.constant 1.000000e+00 : f32
    %159 = vector.broadcast %cst_31 : f32 to vector<8x128xf32>
    %160 = arith.addf %159, %158 : vector<8x128xf32>
    %161 = arith.divf %159, %160 : vector<8x128xf32>
    %162 = vector.extract_strided_slice %161 {offsets = [0, 0], sizes = [8, 64], strides = [1, 1]} : vector<8x128xf32> to vector<8x64xf32>
    %163 = vector.extract_strided_slice %161 {offsets = [0, 64], sizes = [8, 64], strides = [1, 1]} : vector<8x128xf32> to vector<8x64xf32>
    %164 = vector.extract_strided_slice %152 {offsets = [0, 128], sizes = [8, 64], strides = [1, 1]} : vector<8x192xf32> to vector<8x64xf32>
    %165 = vector.extract_strided_slice %153 {offsets = [0, 128], sizes = [8, 64], strides = [1, 1]} : vector<8x192xf32> to vector<8x64xf32>
    %166 = vector.broadcast %20 : vector<1x64xf32> to vector<8x64xf32>
    %167 = arith.addf %165, %166 : vector<8x64xf32>
    %168 = arith.mulf %162, %167 : vector<8x64xf32>
    %169 = arith.addf %164, %168 : vector<8x64xf32>
    %170 = math.tanh %169 : vector<8x64xf32>
    %cst_32 = arith.constant 1.000000e+00 : f32
    %171 = vector.broadcast %cst_32 : f32 to vector<8x64xf32>
    %172 = arith.subf %171, %163 : vector<8x64xf32>
    %173 = arith.mulf %172, %170 : vector<8x64xf32>
    %174 = arith.mulf %163, %149 : vector<8x64xf32>
    %175 = arith.addf %173, %174 : vector<8x64xf32>
    %176 = vector.extract_strided_slice %175 {offsets = [0, 0], sizes = [8, 32], strides = [1, 1]} : vector<8x64xf32> to vector<8x32xf32>
    %177 = vector.extract_strided_slice %175 {offsets = [0, 32], sizes = [8, 32], strides = [1, 1]} : vector<8x64xf32> to vector<8x32xf32>
    %178 = vector.extract_strided_slice %18 {offsets = [48, 0], sizes = [8, 192], strides = [1, 1]} : vector<64x192xf32> to vector<8x192xf32>
    %cst_33 = arith.constant dense<0.000000e+00> : vector<8x192xf32>
    %179 = tpu.matmul %175, %19, %cst_33 {dimension_numbers = #tpu.dot_dimension_numbers<[1], [0], [0], [1], [0, 0, 1, 1], [], []>} : vector<8x64xf32>, vector<64x192xf32>, vector<8x192xf32> -> vector<8x192xf32>
    %180 = vector.extract_strided_slice %178 {offsets = [0, 0], sizes = [8, 128], strides = [1, 1]} : vector<8x192xf32> to vector<8x128xf32>
    %181 = vector.extract_strided_slice %179 {offsets = [0, 0], sizes = [8, 128], strides = [1, 1]} : vector<8x192xf32> to vector<8x128xf32>
    %182 = arith.addf %180, %181 : vector<8x128xf32>
    %183 = arith.negf %182 : vector<8x128xf32>
    %184 = math.exp %183 : vector<8x128xf32>
    %cst_34 = arith.constant 1.000000e+00 : f32
    %185 = vector.broadcast %cst_34 : f32 to vector<8x128xf32>
    %186 = arith.addf %185, %184 : vector<8x128xf32>
    %187 = arith.divf %185, %186 : vector<8x128xf32>
    %188 = vector.extract_strided_slice %187 {offsets = [0, 0], sizes = [8, 64], strides = [1, 1]} : vector<8x128xf32> to vector<8x64xf32>
    %189 = vector.extract_strided_slice %187 {offsets = [0, 64], sizes = [8, 64], strides = [1, 1]} : vector<8x128xf32> to vector<8x64xf32>
    %190 = vector.extract_strided_slice %178 {offsets = [0, 128], sizes = [8, 64], strides = [1, 1]} : vector<8x192xf32> to vector<8x64xf32>
    %191 = vector.extract_strided_slice %179 {offsets = [0, 128], sizes = [8, 64], strides = [1, 1]} : vector<8x192xf32> to vector<8x64xf32>
    %192 = vector.broadcast %20 : vector<1x64xf32> to vector<8x64xf32>
    %193 = arith.addf %191, %192 : vector<8x64xf32>
    %194 = arith.mulf %188, %193 : vector<8x64xf32>
    %195 = arith.addf %190, %194 : vector<8x64xf32>
    %196 = math.tanh %195 : vector<8x64xf32>
    %cst_35 = arith.constant 1.000000e+00 : f32
    %197 = vector.broadcast %cst_35 : f32 to vector<8x64xf32>
    %198 = arith.subf %197, %189 : vector<8x64xf32>
    %199 = arith.mulf %198, %196 : vector<8x64xf32>
    %200 = arith.mulf %189, %175 : vector<8x64xf32>
    %201 = arith.addf %199, %200 : vector<8x64xf32>
    %202 = vector.extract_strided_slice %201 {offsets = [0, 0], sizes = [8, 32], strides = [1, 1]} : vector<8x64xf32> to vector<8x32xf32>
    %203 = vector.extract_strided_slice %201 {offsets = [0, 32], sizes = [8, 32], strides = [1, 1]} : vector<8x64xf32> to vector<8x32xf32>
    %204 = vector.extract_strided_slice %18 {offsets = [56, 0], sizes = [8, 192], strides = [1, 1]} : vector<64x192xf32> to vector<8x192xf32>
    %cst_36 = arith.constant dense<0.000000e+00> : vector<8x192xf32>
    %205 = tpu.matmul %201, %19, %cst_36 {dimension_numbers = #tpu.dot_dimension_numbers<[1], [0], [0], [1], [0, 0, 1, 1], [], []>} : vector<8x64xf32>, vector<64x192xf32>, vector<8x192xf32> -> vector<8x192xf32>
    %206 = vector.extract_strided_slice %204 {offsets = [0, 0], sizes = [8, 128], strides = [1, 1]} : vector<8x192xf32> to vector<8x128xf32>
    %207 = vector.extract_strided_slice %205 {offsets = [0, 0], sizes = [8, 128], strides = [1, 1]} : vector<8x192xf32> to vector<8x128xf32>
    %208 = arith.addf %206, %207 : vector<8x128xf32>
    %209 = arith.negf %208 : vector<8x128xf32>
    %210 = math.exp %209 : vector<8x128xf32>
    %cst_37 = arith.constant 1.000000e+00 : f32
    %211 = vector.broadcast %cst_37 : f32 to vector<8x128xf32>
    %212 = arith.addf %211, %210 : vector<8x128xf32>
    %213 = arith.divf %211, %212 : vector<8x128xf32>
    %214 = vector.extract_strided_slice %213 {offsets = [0, 0], sizes = [8, 64], strides = [1, 1]} : vector<8x128xf32> to vector<8x64xf32>
    %215 = vector.extract_strided_slice %213 {offsets = [0, 64], sizes = [8, 64], strides = [1, 1]} : vector<8x128xf32> to vector<8x64xf32>
    %216 = vector.extract_strided_slice %204 {offsets = [0, 128], sizes = [8, 64], strides = [1, 1]} : vector<8x192xf32> to vector<8x64xf32>
    %217 = vector.extract_strided_slice %205 {offsets = [0, 128], sizes = [8, 64], strides = [1, 1]} : vector<8x192xf32> to vector<8x64xf32>
    %218 = vector.broadcast %20 : vector<1x64xf32> to vector<8x64xf32>
    %219 = arith.addf %217, %218 : vector<8x64xf32>
    %220 = arith.mulf %214, %219 : vector<8x64xf32>
    %221 = arith.addf %216, %220 : vector<8x64xf32>
    %222 = math.tanh %221 : vector<8x64xf32>
    %cst_38 = arith.constant 1.000000e+00 : f32
    %223 = vector.broadcast %cst_38 : f32 to vector<8x64xf32>
    %224 = arith.subf %223, %215 : vector<8x64xf32>
    %225 = arith.mulf %224, %222 : vector<8x64xf32>
    %226 = arith.mulf %215, %201 : vector<8x64xf32>
    %227 = arith.addf %225, %226 : vector<8x64xf32>
    %228 = vector.extract_strided_slice %227 {offsets = [0, 0], sizes = [8, 32], strides = [1, 1]} : vector<8x64xf32> to vector<8x32xf32>
    %229 = vector.extract_strided_slice %227 {offsets = [0, 32], sizes = [8, 32], strides = [1, 1]} : vector<8x64xf32> to vector<8x32xf32>
    %230 = tpu.concatenate %46, %72, %98, %124, %150, %176, %202, %228 in 0 : vector<8x32xf32>, vector<8x32xf32>, vector<8x32xf32>, vector<8x32xf32>, vector<8x32xf32>, vector<8x32xf32>, vector<8x32xf32>, vector<8x32xf32> -> vector<64x32xf32>
    %231 = tpu.concatenate %229, %203, %177, %151, %125, %99, %73, %47 in 0 : vector<8x32xf32>, vector<8x32xf32>, vector<8x32xf32>, vector<8x32xf32>, vector<8x32xf32>, vector<8x32xf32>, vector<8x32xf32>, vector<8x32xf32> -> vector<64x32xf32>
    %232 = tpu.concatenate %230, %231 in 1 : vector<64x32xf32>, vector<64x32xf32> -> vector<64x64xf32>
    %c0_39 = arith.constant 0 : index
    %c0_40 = arith.constant 0 : index
    %233 = vector.load %arg9[%c0_39, %c0_40] : memref<64x64xf32, #tpu.memory_space<vmem>>, vector<64x64xf32>
    tpu.vector_store %arg9[%c0_39, %c0_40], %232 {strides = array<i32>} : memref<64x64xf32, #tpu.memory_space<vmem>>, vector<64x64xf32>,
    %c0_41 = arith.constant 0 : index
    %c0_42 = arith.constant 0 : index
    %234 = vector.load %arg7[%c0_41, %c0_42] : memref<64x32xf32, #tpu.memory_space<vmem>>, vector<64x32xf32>
    %cst_43 = arith.constant dense<0.000000e+00> : vector<8x32xf32>
    %235 = tpu.matmul %227, %234, %cst_43 {dimension_numbers = #tpu.dot_dimension_numbers<[1], [0], [0], [1], [0, 0, 1, 1], [], []>} : vector<8x64xf32>, vector<64x32xf32>, vector<8x32xf32> -> vector<8x32xf32>
    %c0_44 = arith.constant 0 : index
    %c0_45 = arith.constant 0 : index
    %236 = vector.load %arg8[%c0_44, %c0_45] : memref<1x32xf32, #tpu.memory_space<vmem>>, vector<1x32xf32>
    %237 = vector.broadcast %236 : vector<1x32xf32> to vector<8x32xf32>
    %238 = arith.addf %235, %237 : vector<8x32xf32>
    %239 = math.tanh %238 : vector<8x32xf32>
    %c0_46 = arith.constant 0 : index
    %c0_47 = arith.constant 0 : index
    %240 = vector.load %arg10[%c0_46, %c0_47] : memref<8x32xf32, #tpu.memory_space<vmem>>, vector<8x32xf32>
    tpu.vector_store %arg10[%c0_46, %c0_47], %239 {strides = array<i32>} : memref<8x32xf32, #tpu.memory_space<vmem>>, vector<8x32xf32>,
    return
  }
}

</mosaic_0001>

<llo_original>
// kernel: encoder_forward.1
$region0: #{encoder_forward.1}
  #allocation0 [shape = 'u32[]', space=smem, size = 0x4, offset = 0x4, fixed_abs, tag = 'smem constant byte address 0x4 - core index']
  #allocation1 [shape = 'u32[144,128]{1,0:T(1,128)}', space=vmem, size = 0x12000, scoped, tag = 'internal scratch']
  %s0 = inlined_call_operand.vmem [shape: s32[64,1], index: 0, kind: input, shape index: {}]
  %s1 = inlined_call_operand.vmem [shape: s32[64,1], index: 1, kind: input, shape index: {}]
  %s2 = inlined_call_operand.vmem [shape: f32[128,192], index: 2, kind: input, shape index: {}]
  %s3 = inlined_call_operand.vmem [shape: f32[128,192], index: 3, kind: input, shape index: {}]
  %s4 = inlined_call_operand.vmem [shape: f32[1,192], index: 4, kind: input, shape index: {}]
  %s5 = inlined_call_operand.vmem [shape: f32[64,192], index: 5, kind: input, shape index: {}]
  %s6 = inlined_call_operand.vmem [shape: f32[1,64], index: 6, kind: input, shape index: {}]
  %s7 = inlined_call_operand.vmem [shape: f32[64,32], index: 7, kind: input, shape index: {}]
  %s8 = inlined_call_operand.vmem [shape: f32[1,32], index: 8, kind: input, shape index: {}]
  %s9 = inlined_call_operand.vmem [shape: f32[64,64], index: 9, kind: output, shape index: {0}]
  %s10 = inlined_call_operand.vmem [shape: f32[8,32], index: 10, kind: output, shape index: {1}]
  %11 = xla_tuple %s9, %s10
  %s12 = sld [smem:[#allocation0]]
  $region54: #{encoder_forward.1} parent=0
    _
  %s14 = ssub.s32 1, %s12
  %s15 = scalar_select 0, %s14, %s12
  // Predicated region
  $region2: #{encoder_forward.1} parent=0 // pred_check
    _
  $region3: #{encoder_forward.1} parent=0 // pred_check_branch
    %17 = sbr.rel (0) target = $region5
  $region4: #{encoder_forward.1} parent=0 // pred_region
    _
  $region5: #{encoder_forward.1} parent=0 // pred_fallthru
    _
  // Predicated region
  $region6: #{encoder_forward.1} parent=0 // pred_check
    _
  $region7: #{encoder_forward.1} parent=0 // pred_check_branch
    %19 = sbr.rel (0) target = $region9
  $region8: #{encoder_forward.1} parent=0 // pred_region
    _
  $region9: #{encoder_forward.1} parent=0 // pred_fallthru
    _
  // Predicated region
  $region10: #{encoder_forward.1} parent=0 // pred_check
    _
  $region11: #{encoder_forward.1} parent=0 // pred_check_branch
    %21 = sbr.rel (0) target = $region13
  $region12: #{encoder_forward.1} parent=0 // pred_region
    _
  $region13: #{encoder_forward.1} parent=0 // pred_fallthru
    _
  // Predicated region
  $region14: #{encoder_forward.1} parent=0 // pred_check
    _
  $region15: #{encoder_forward.1} parent=0 // pred_check_branch
    %23 = sbr.rel (0) target = $region17
  $region16: #{encoder_forward.1} parent=0 // pred_region
    _
  $region17: #{encoder_forward.1} parent=0 // pred_fallthru
    _
  // Predicated region
  $region18: #{encoder_forward.1} parent=0 // pred_check
    _
  $region19: #{encoder_forward.1} parent=0 // pred_check_branch
    %25 = sbr.rel (0) target = $region21
  $region20: #{encoder_forward.1} parent=0 // pred_region
    _
  $region21: #{encoder_forward.1} parent=0 // pred_fallthru
    _
  // Predicated region
  $region22: #{encoder_forward.1} parent=0 // pred_check
    _
  $region23: #{encoder_forward.1} parent=0 // pred_check_branch
    %27 = sbr.rel (0) target = $region25
  $region24: #{encoder_forward.1} parent=0 // pred_region
    _
  $region25: #{encoder_forward.1} parent=0 // pred_fallthru
    _
  // Predicated region
  $region26: #{encoder_forward.1} parent=0 // pred_check
    _
  $region27: #{encoder_forward.1} parent=0 // pred_check_branch
    %29 = sbr.rel (0) target = $region29
  $region28: #{encoder_forward.1} parent=0 // pred_region
    _
  $region29: #{encoder_forward.1} parent=0 // pred_fallthru
    _
  // Predicated region
  $region30: #{encoder_forward.1} parent=0 // pred_check
    _
  $region31: #{encoder_forward.1} parent=0 // pred_check_branch
    %31 = sbr.rel (0) target = $region33
  $region32: #{encoder_forward.1} parent=0 // pred_region
    _
  $region33: #{encoder_forward.1} parent=0 // pred_fallthru
    _
  // Predicated region
  $region34: #{encoder_forward.1} parent=0 // pred_check
    _
  $region35: #{encoder_forward.1} parent=0 // pred_check_branch
    %33 = sbr.rel (0) target = $region37
  $region36: #{encoder_forward.1} parent=0 // pred_region
    _
  $region37: #{encoder_forward.1} parent=0 // pred_fallthru
    _
  %v34 = vlaneseq
  %v35 = vand.u32 %v34, 127
  %v36 = vld [vmem:[%s0] sm:$0xff]
  %v37 = vld [vmem:[%s0 + $0x8] sm:$0xff]
  %v38 = vld [vmem:[%s0 + $0x10] sm:$0xff]
  %v39 = vld [vmem:[%s0 + $0x18] sm:$0xff]
  %v40 = vld [vmem:[%s0 + $0x20] sm:$0xff]
  %v41 = vld [vmem:[%s0 + $0x28] sm:$0xff]
  %v42 = vld [vmem:[%s0 + $0x30] sm:$0xff]
  %v43 = vld [vmem:[%s0 + $0x38] sm:$0xff]
  %44 = vset.pattern.permute.xlu0 0
  %45 = vperm.xlu0 %44, %v36
  %v46 = vpop.permute.xlu0 %45
  %47 = vset.pattern.permute.xlu0 0
  %48 = vperm.xlu0 %47, %v37
  %v49 = vpop.permute.xlu0 %48
  %50 = vset.pattern.permute.xlu0 0
  %51 = vperm.xlu0 %50, %v38
  %v52 = vpop.permute.xlu0 %51
  %53 = vset.pattern.permute.xlu0 0
  %54 = vperm.xlu0 %53, %v39
  %v55 = vpop.permute.xlu0 %54
  %56 = vset.pattern.permute.xlu0 0
  %57 = vperm.xlu0 %56, %v40
  %v58 = vpop.permute.xlu0 %57
  %59 = vset.pattern.permute.xlu0 0
  %60 = vperm.xlu0 %59, %v41
  %v61 = vpop.permute.xlu0 %60
  %62 = vset.pattern.permute.xlu0 0
  %63 = vperm.xlu0 %62, %v42
  %v64 = vpop.permute.xlu0 %63
  %65 = vset.pattern.permute.xlu0 0
  %66 = vperm.xlu0 %65, %v43
  %v67 = vpop.permute.xlu0 %66
  %vm68 = vcmp.eq.s32.totalorder %v35, %v46
  %vm69 = vcmp.eq.s32.totalorder %v35, %v49
  %vm70 = vcmp.eq.s32.totalorder %v35, %v52
  %vm71 = vcmp.eq.s32.totalorder %v35, %v55
  %vm72 = vcmp.eq.s32.totalorder %v35, %v58
  %vm73 = vcmp.eq.s32.totalorder %v35, %v61
  %vm74 = vcmp.eq.s32.totalorder %v35, %v64
  %vm75 = vcmp.eq.s32.totalorder %v35, %v67
  %v76 = vsel %vm68, 1, 0
  %v77 = vsel %vm69, 1, 0
  %v78 = vsel %vm70, 1, 0
  %v79 = vsel %vm71, 1, 0
  %v80 = vsel %vm72, 1, 0
  %v81 = vsel %vm73, 1, 0
  %v82 = vsel %vm74, 1, 0
  %v83 = vsel %vm75, 1, 0
  %v84 = vcvt.s32.f32 %v76
  %v85 = vcvt.s32.f32 %v77
  %v86 = vcvt.s32.f32 %v78
  %v87 = vcvt.s32.f32 %v79
  %v88 = vcvt.s32.f32 %v80
  %v89 = vcvt.s32.f32 %v81
  %v90 = vcvt.s32.f32 %v82
  %v91 = vcvt.s32.f32 %v83
  %v92 = vld [vmem:[%s1] sm:$0xff]
  %v93 = vld [vmem:[%s1 + $0x8] sm:$0xff]
  %v94 = vld [vmem:[%s1 + $0x10] sm:$0xff]
  %v95 = vld [vmem:[%s1 + $0x18] sm:$0xff]
  %v96 = vld [vmem:[%s1 + $0x20] sm:$0xff]
  %v97 = vld [vmem:[%s1 + $0x28] sm:$0xff]
  %v98 = vld [vmem:[%s1 + $0x30] sm:$0xff]
  %v99 = vld [vmem:[%s1 + $0x38] sm:$0xff]
  %100 = vset.pattern.permute.xlu0 0
  %101 = vperm.xlu0 %100, %v92
  %v102 = vpop.permute.xlu0 %101
  %103 = vset.pattern.permute.xlu0 0
  %104 = vperm.xlu0 %103, %v93
  %v105 = vpop.permute.xlu0 %104
  %106 = vset.pattern.permute.xlu0 0
  %107 = vperm.xlu0 %106, %v94
  %v108 = vpop.permute.xlu0 %107
  %109 = vset.pattern.permute.xlu0 0
  %110 = vperm.xlu0 %109, %v95
  %v111 = vpop.permute.xlu0 %110
  %112 = vset.pattern.permute.xlu0 0
  %113 = vperm.xlu0 %112, %v96
  %v114 = vpop.permute.xlu0 %113
  %115 = vset.pattern.permute.xlu0 0
  %116 = vperm.xlu0 %115, %v97
  %v117 = vpop.permute.xlu0 %116
  %118 = vset.pattern.permute.xlu0 0
  %119 = vperm.xlu0 %118, %v98
  %v120 = vpop.permute.xlu0 %119
  %121 = vset.pattern.permute.xlu0 0
  %122 = vperm.xlu0 %121, %v99
  %v123 = vpop.permute.xlu0 %122
  %vm124 = vcmp.eq.s32.totalorder %v35, %v102
  %vm125 = vcmp.eq.s32.totalorder %v35, %v105
  %vm126 = vcmp.eq.s32.totalorder %v35, %v108
  %vm127 = vcmp.eq.s32.totalorder %v35, %v111
  %vm128 = vcmp.eq.s32.totalorder %v35, %v114
  %vm129 = vcmp.eq.s32.totalorder %v35, %v117
  %vm130 = vcmp.eq.s32.totalorder %v35, %v120
  %vm131 = vcmp.eq.s32.totalorder %v35, %v123
  %v132 = vsel %vm124, 1, 0
  %v133 = vsel %vm125, 1, 0
  %v134 = vsel %vm126, 1, 0
  %v135 = vsel %vm127, 1, 0
  %v136 = vsel %vm128, 1, 0
  %v137 = vsel %vm129, 1, 0
  %v138 = vsel %vm130, 1, 0
  %v139 = vsel %vm131, 1, 0
  %v140 = vcvt.s32.f32 %v132
  %v141 = vcvt.s32.f32 %v133
  %v142 = vcvt.s32.f32 %v134
  %v143 = vcvt.s32.f32 %v135
  %v144 = vcvt.s32.f32 %v136
  %v145 = vcvt.s32.f32 %v137
  %v146 = vcvt.s32.f32 %v138
  %v147 = vcvt.s32.f32 %v139
  %v148 = vld [vmem:[%s2] sm:$0xff]
  %v149 = vld [vmem:[%s2 + $0x8] sm:$0xff]
  %v150 = vld [vmem:[%s2 + $0x10] sm:$0xff]
  %v151 = vld [vmem:[%s2 + $0x18] sm:$0xff]
  %v152 = vld [vmem:[%s2 + $0x20] sm:$0xff]
  %v153 = vld [vmem:[%s2 + $0x28] sm:$0xff]
  %v154 = vld [vmem:[%s2 + $0x30] sm:$0xff]
  %v155 = vld [vmem:[%s2 + $0x38] sm:$0xff]
  %v156 = vld [vmem:[%s2 + $0x40] sm:$0xff]
  %v157 = vld [vmem:[%s2 + $0x48] sm:$0xff]
  %v158 = vld [vmem:[%s2 + $0x50] sm:$0xff]
  %v159 = vld [vmem:[%s2 + $0x58] sm:$0xff]
  %v160 = vld [vmem:[%s2 + $0x60] sm:$0xff]
  %v161 = vld [vmem:[%s2 + $0x68] sm:$0xff]
  %v162 = vld [vmem:[%s2 + $0x70] sm:$0xff]
  %v163 = vld [vmem:[%s2 + $0x78] sm:$0xff]
  %v164 = vld [vmem:[%s2 + $0x80] sm:$0xff]
  %v165 = vld [vmem:[%s2 + $0x88] sm:$0xff]
  %v166 = vld [vmem:[%s2 + $0x90] sm:$0xff]
  %v167 = vld [vmem:[%s2 + $0x98] sm:$0xff]
  %v168 = vld [vmem:[%s2 + $0xa0] sm:$0xff]
  %v169 = vld [vmem:[%s2 + $0xa8] sm:$0xff]
  %v170 = vld [vmem:[%s2 + $0xb0] sm:$0xff]
  %v171 = vld [vmem:[%s2 + $0xb8] sm:$0xff]
  %v172 = vld [vmem:[%s2 + $0xc0] sm:$0xff]
  %v173 = vld [vmem:[%s2 + $0xc8] sm:$0xff]
  %v174 = vld [vmem:[%s2 + $0xd0] sm:$0xff]
  %v175 = vld [vmem:[%s2 + $0xd8] sm:$0xff]
  %v176 = vld [vmem:[%s2 + $0xe0] sm:$0xff]
  %v177 = vld [vmem:[%s2 + $0xe8] sm:$0xff]
  %v178 = vld [vmem:[%s2 + $0xf0] sm:$0xff]
  %v179 = vld [vmem:[%s2 + $0xf8] sm:$0xff]
  %v180 = vld [vmem:[%s3] sm:$0xff]
  %v181 = vld [vmem:[%s3 + $0x8] sm:$0xff]
  %v182 = vld [vmem:[%s3 + $0x10] sm:$0xff]
  %v183 = vld [vmem:[%s3 + $0x18] sm:$0xff]
  %v184 = vld [vmem:[%s3 + $0x20] sm:$0xff]
  %v185 = vld [vmem:[%s3 + $0x28] sm:$0xff]
  %v186 = vld [vmem:[%s3 + $0x30] sm:$0xff]
  %v187 = vld [vmem:[%s3 + $0x38] sm:$0xff]
  %v188 = vld [vmem:[%s3 + $0x40] sm:$0xff]
  %v189 = vld [vmem:[%s3 + $0x48] sm:$0xff]
  %v190 = vld [vmem:[%s3 + $0x50] sm:$0xff]
  %v191 = vld [vmem:[%s3 + $0x58] sm:$0xff]
  %v192 = vld [vmem:[%s3 + $0x60] sm:$0xff]
  %v193 = vld [vmem:[%s3 + $0x68] sm:$0xff]
  %v194 = vld [vmem:[%s3 + $0x70] sm:$0xff]
  %v195 = vld [vmem:[%s3 + $0x78] sm:$0xff]
  %v196 = vld [vmem:[%s3 + $0x80] sm:$0xff]
  %v197 = vld [vmem:[%s3 + $0x88] sm:$0xff]
  %v198 = vld [vmem:[%s3 + $0x90] sm:$0xff]
  %v199 = vld [vmem:[%s3 + $0x98] sm:$0xff]
  %v200 = vld [vmem:[%s3 + $0xa0] sm:$0xff]
  %v201 = vld [vmem:[%s3 + $0xa8] sm:$0xff]
  %v202 = vld [vmem:[%s3 + $0xb0] sm:$0xff]
  %v203 = vld [vmem:[%s3 + $0xb8] sm:$0xff]
  %v204 = vld [vmem:[%s3 + $0xc0] sm:$0xff]
  %v205 = vld [vmem:[%s3 + $0xc8] sm:$0xff]
  %v206 = vld [vmem:[%s3 + $0xd0] sm:$0xff]
  %v207 = vld [vmem:[%s3 + $0xd8] sm:$0xff]
  %v208 = vld [vmem:[%s3 + $0xe0] sm:$0xff]
  %v209 = vld [vmem:[%s3 + $0xe8] sm:$0xff]
  %v210 = vld [vmem:[%s3 + $0xf0] sm:$0xff]
  %v211 = vld [vmem:[%s3 + $0xf8] sm:$0xff]
  %212 = vmatprep.subr.mxu0 %v211
  %213 = vmatpush1.msra.mxu0 %v210
  %214 = vmatprep.subr.mxu0 %v209
  %215 = vmatpush1.msra.mxu0 %v208
  %216 = vmatprep.subr.mxu0 %v207
  %217 = vmatpush1.msra.mxu0 %v206
  %218 = vmatprep.subr.mxu0 %v205
  %219 = vmatpush1.msra.mxu0 %v204
  %220 = vmatprep.subr.mxu0 %v203
  %221 = vmatpush1.msra.mxu0 %v202
  %222 = vmatprep.subr.mxu0 %v201
  %223 = vmatpush1.msra.mxu0 %v200
  %224 = vmatprep.subr.mxu0 %v199
  %225 = vmatpush1.msra.mxu0 %v198
  %226 = vmatprep.subr.mxu0 %v197
  %227 = vmatpush1.msra.mxu0 %v196
  %228 = vmatprep.subr.mxu0 %v195
  %229 = vmatpush1.msra.mxu0 %v194
  %230 = vmatprep.subr.mxu0 %v193
  %231 = vmatpush1.msra.mxu0 %v192
  %232 = vmatprep.subr.mxu0 %v191
  %233 = vmatpush1.msra.mxu0 %v190
  %234 = vmatprep.subr.mxu0 %v189
  %235 = vmatpush1.msra.mxu0 %v188
  %236 = vmatprep.subr.mxu0 %v187
  %237 = vmatpush1.msra.mxu0 %v186
  %238 = vmatprep.subr.mxu0 %v185
  %239 = vmatpush1.msra.mxu0 %v184
  %240 = vmatprep.subr.mxu0 %v183
  %241 = vmatpush1.msra.mxu0 %v182
  %242 = vmatprep.subr.mxu0 %v181
  %243 = vmatpush1.msra.mxu0 %v180
  %244 = vmatprep.subr.mxu0 0.0
  %245 = vmatpush2.msra.mxu0 0.0
  %246 = vmatprep.subr.mxu0 0.0
  %247 = vmatpush2.msra.mxu0 0.0
  %248 = vmatprep.subr.mxu0 0.0
  %249 = vmatpush2.msra.mxu0 0.0
  %250 = vmatprep.subr.mxu0 0.0
  %251 = vmatpush2.msra.mxu0 0.0
  %252 = vmatprep.subr.mxu0 0.0
  %253 = vmatpush2.msra.mxu0 0.0
  %254 = vmatprep.subr.mxu0 0.0
  %255 = vmatpush2.msra.mxu0 0.0
  %256 = vmatprep.subr.mxu0 0.0
  %257 = vmatpush2.msra.mxu0 0.0
  %258 = vmatprep.subr.mxu0 0.0
  %259 = vmatpush2.msra.mxu0 0.0
  %260 = vmatprep.subr.mxu0 0.0
  %261 = vmatpush2.msra.mxu0 0.0
  %262 = vmatprep.subr.mxu0 0.0
  %263 = vmatpush2.msra.mxu0 0.0
  %264 = vmatprep.subr.mxu0 0.0
  %265 = vmatpush2.msra.mxu0 0.0
  %266 = vmatprep.subr.mxu0 0.0
  %267 = vmatpush2.msra.mxu0 0.0
  %268 = vmatprep.subr.mxu0 0.0
  %269 = vmatpush2.msra.mxu0 0.0
  %270 = vmatprep.subr.mxu0 0.0
  %271 = vmatpush2.msra.mxu0 0.0
  %272 = vmatprep.subr.mxu0 0.0
  %273 = vmatpush2.msra.mxu0 0.0
  %274 = vmatprep.subr.mxu0 0.0
  %275 = vmatpush2.msra.mxu0 0.0
  %276 = vmatprep.mubr.f32.mxu0 0.0
  %277 = vmatmul.mubr.f32.gmra.mxu0 %v140
  %v278 = vpop.f32.mrf.mxu0
  %v279 = vadd.f32 0.0, %v278
  %v280 = vpop.f32.mrf.mxu0
  %v281 = vadd.f32 0.0, %v280
  %282 = vmatprep.mubr.f32.mxu0 0.0
  %283 = vmatmul.mubr.f32.gmra.mxu0 %v141
  %v284 = vpop.f32.mrf.mxu0
  %v285 = vadd.f32 0.0, %v284
  %v286 = vpop.f32.mrf.mxu0
  %v287 = vadd.f32 0.0, %v286
  %288 = vmatprep.mubr.f32.mxu0 0.0
  %289 = vmatmul.mubr.f32.gmra.mxu0 %v142
  %v290 = vpop.f32.mrf.mxu0
  %v291 = vadd.f32 0.0, %v290
  %v292 = vpop.f32.mrf.mxu0
  %v293 = vadd.f32 0.0, %v292
  %294 = vmatprep.mubr.f32.mxu0 0.0
  %295 = vmatmul.mubr.f32.gmra.mxu0 %v143
  %v296 = vpop.f32.mrf.mxu0
  %v297 = vadd.f32 0.0, %v296
  %v298 = vpop.f32.mrf.mxu0
  %v299 = vadd.f32 0.0, %v298
  %300 = vmatprep.mubr.f32.mxu0 0.0
  %301 = vmatmul.mubr.f32.gmra.mxu0 %v144
  %v302 = vpop.f32.mrf.mxu0
  %v303 = vadd.f32 0.0, %v302
  %v304 = vpop.f32.mrf.mxu0
  %v305 = vadd.f32 0.0, %v304
  %306 = vmatprep.mubr.f32.mxu0 0.0
  %307 = vmatmul.mubr.f32.gmra.mxu0 %v145
  %v308 = vpop.f32.mrf.mxu0
  %v309 = vadd.f32 0.0, %v308
  %v310 = vpop.f32.mrf.mxu0
  %v311 = vadd.f32 0.0, %v310
  %312 = vmatprep.mubr.f32.mxu0 0.0
  %313 = vmatmul.mubr.f32.gmra.mxu0 %v146
  %v314 = vpop.f32.mrf.mxu0
  %v315 = vadd.f32 0.0, %v314
  %v316 = vpop.f32.mrf.mxu0
  %v317 = vadd.f32 0.0, %v316
  %318 = vmatprep.mubr.f32.mxu0 0.0
  %319 = vmatmul.mubr.f32.gmra.mxu0 %v147
  %v320 = vpop.f32.mrf.mxu0
  %v321 = vadd.f32 0.0, %v320
  %v322 = vpop.f32.mrf.mxu0
  %v323 = vadd.f32 0.0, %v322
  %324 = vdwg.mxu0
  %325 = vmatprep.subr.mxu0 %v179
  %326 = vmatpush1.msra.mxu0 %v178
  %327 = vmatprep.subr.mxu0 %v177
  %328 = vmatpush1.msra.mxu0 %v176
  %329 = vmatprep.subr.mxu0 %v175
  %330 = vmatpush1.msra.mxu0 %v174
  %331 = vmatprep.subr.mxu0 %v173
  %332 = vmatpush1.msra.mxu0 %v172
  %333 = vmatprep.subr.mxu0 %v171
  %334 = vmatpush1.msra.mxu0 %v170
  %335 = vmatprep.subr.mxu0 %v169
  %336 = vmatpush1.msra.mxu0 %v168
  %337 = vmatprep.subr.mxu0 %v167
  %338 = vmatpush1.msra.mxu0 %v166
  %339 = vmatprep.subr.mxu0 %v165
  %340 = vmatpush1.msra.mxu0 %v164
  %341 = vmatprep.subr.mxu0 %v163
  %342 = vmatpush1.msra.mxu0 %v162
  %343 = vmatprep.subr.mxu0 %v161
  %344 = vmatpush1.msra.mxu0 %v160
  %345 = vmatprep.subr.mxu0 %v159
  %346 = vmatpush1.msra.mxu0 %v158
  %347 = vmatprep.subr.mxu0 %v157
  %348 = vmatpush1.msra.mxu0 %v156
  %349 = vmatprep.subr.mxu0 %v155
  %350 = vmatpush1.msra.mxu0 %v154
  %351 = vmatprep.subr.mxu0 %v153
  %352 = vmatpush1.msra.mxu0 %v152
  %353 = vmatprep.subr.mxu0 %v151
  %354 = vmatpush1.msra.mxu0 %v150
  %355 = vmatprep.subr.mxu0 %v149
  %356 = vmatpush1.msra.mxu0 %v148
  %357 = vmatprep.subr.mxu0 0.0
  %358 = vmatpush2.msra.mxu0 0.0
  %359 = vmatprep.subr.mxu0 0.0
  %360 = vmatpush2.msra.mxu0 0.0
  %361 = vmatprep.subr.mxu0 0.0
  %362 = vmatpush2.msra.mxu0 0.0
  %363 = vmatprep.subr.mxu0 0.0
  %364 = vmatpush2.msra.mxu0 0.0
  %365 = vmatprep.subr.mxu0 0.0
  %366 = vmatpush2.msra.mxu0 0.0
  %367 = vmatprep.subr.mxu0 0.0
  %368 = vmatpush2.msra.mxu0 0.0
  %369 = vmatprep.subr.mxu0 0.0
  %370 = vmatpush2.msra.mxu0 0.0
  %371 = vmatprep.subr.mxu0 0.0
  %372 = vmatpush2.msra.mxu0 0.0
  %373 = vmatprep.subr.mxu0 0.0
  %374 = vmatpush2.msra.mxu0 0.0
  %375 = vmatprep.subr.mxu0 0.0
  %376 = vmatpush2.msra.mxu0 0.0
  %377 = vmatprep.subr.mxu0 0.0
  %378 = vmatpush2.msra.mxu0 0.0
  %379 = vmatprep.subr.mxu0 0.0
  %380 = vmatpush2.msra.mxu0 0.0
  %381 = vmatprep.subr.mxu0 0.0
  %382 = vmatpush2.msra.mxu0 0.0
  %383 = vmatprep.subr.mxu0 0.0
  %384 = vmatpush2.msra.mxu0 0.0
  %385 = vmatprep.subr.mxu0 0.0
  %386 = vmatpush2.msra.mxu0 0.0
  %387 = vmatprep.subr.mxu0 0.0
  %388 = vmatpush2.msra.mxu0 0.0
  %389 = vmatprep.mubr.f32.mxu0 0.0
  %390 = vmatmul.mubr.f32.gmra.mxu0 %v84
  %v391 = vpop.f32.mrf.mxu0
  %v392 = vadd.f32 %v279, %v391
  %v393 = vpop.f32.mrf.mxu0
  %v394 = vadd.f32 %v281, %v393
  %395 = vmatprep.mubr.f32.mxu0 0.0
  %396 = vmatmul.mubr.f32.gmra.mxu0 %v85
  %v397 = vpop.f32.mrf.mxu0
  %v398 = vadd.f32 %v285, %v397
  %v399 = vpop.f32.mrf.mxu0
  %v400 = vadd.f32 %v287, %v399
  %401 = vmatprep.mubr.f32.mxu0 0.0
  %402 = vmatmul.mubr.f32.gmra.mxu0 %v86
  %v403 = vpop.f32.mrf.mxu0
  %v404 = vadd.f32 %v291, %v403
  %v405 = vpop.f32.mrf.mxu0
  %v406 = vadd.f32 %v293, %v405
  %407 = vmatprep.mubr.f32.mxu0 0.0
  %408 = vmatmul.mubr.f32.gmra.mxu0 %v87
  %v409 = vpop.f32.mrf.mxu0
  %v410 = vadd.f32 %v297, %v409
  %v411 = vpop.f32.mrf.mxu0
  %v412 = vadd.f32 %v299, %v411
  %413 = vmatprep.mubr.f32.mxu0 0.0
  %414 = vmatmul.mubr.f32.gmra.mxu0 %v88
  %v415 = vpop.f32.mrf.mxu0
  %v416 = vadd.f32 %v303, %v415
  %v417 = vpop.f32.mrf.mxu0
  %v418 = vadd.f32 %v305, %v417
  %419 = vmatprep.mubr.f32.mxu0 0.0
  %420 = vmatmul.mubr.f32.gmra.mxu0 %v89
  %v421 = vpop.f32.mrf.mxu0
  %v422 = vadd.f32 %v309, %v421
  %v423 = vpop.f32.mrf.mxu0
  %v424 = vadd.f32 %v311, %v423
  %425 = vmatprep.mubr.f32.mxu0 0.0
  %426 = vmatmul.mubr.f32.gmra.mxu0 %v90
  %v427 = vpop.f32.mrf.mxu0
  %v428 = vadd.f32 %v315, %v427
  %v429 = vpop.f32.mrf.mxu0
  %v430 = vadd.f32 %v317, %v429
  %431 = vmatprep.mubr.f32.mxu0 0.0
  %432 = vmatmul.mubr.f32.gmra.mxu0 %v91
  %v433 = vpop.f32.mrf.mxu0
  %v434 = vadd.f32 %v321, %v433
  %v435 = vpop.f32.mrf.mxu0
  %v436 = vadd.f32 %v323, %v435
  %437 = vdwg.mxu0
  %v438 = vld [vmem:[%s4] sm:$0x3]
  %v440 = vlaneseq
  %v441 = vshrl.u32 %v440, 7
  %v442 = vsub.s32 0, %v441
  %v443 = vrot.slane %v438, %v442
  %v444 = vlaneseq
  %v445 = vshrl.u32 %v444, 7
  %v446 = vsub.s32 1, %v445
  %v447 = vrot.slane %v438, %v446
  %v450 = vadd.f32 %v392, %v443
  %v451 = vadd.f32 %v394, %v447
  %v452 = vadd.f32 %v398, %v443
  %v453 = vadd.f32 %v400, %v447
  %v454 = vadd.f32 %v404, %v443
  %v455 = vadd.f32 %v406, %v447
  %v456 = vadd.f32 %v410, %v443
  %v457 = vadd.f32 %v412, %v447
  %v458 = vadd.f32 %v416, %v443
  %v459 = vadd.f32 %v418, %v447
  %v460 = vadd.f32 %v422, %v443
  %v461 = vadd.f32 %v424, %v447
  %v462 = vadd.f32 %v428, %v443
  %v463 = vadd.f32 %v430, %v447
  %v464 = vadd.f32 %v434, %v443
  %v465 = vadd.f32 %v436, %v447
  %v466 = vld [vmem:[%s5] sm:$0xff]
  %v467 = vld [vmem:[%s5 + $0x8] sm:$0xff]
  %v468 = vld [vmem:[%s5 + $0x10] sm:$0xff]
  %v469 = vld [vmem:[%s5 + $0x18] sm:$0xff]
  %v470 = vld [vmem:[%s5 + $0x20] sm:$0xff]
  %v471 = vld [vmem:[%s5 + $0x28] sm:$0xff]
  %v472 = vld [vmem:[%s5 + $0x30] sm:$0xff]
  %v473 = vld [vmem:[%s5 + $0x38] sm:$0xff]
  %v474 = vld [vmem:[%s5 + $0x40] sm:$0xff]
  %v475 = vld [vmem:[%s5 + $0x48] sm:$0xff]
  %v476 = vld [vmem:[%s5 + $0x50] sm:$0xff]
  %v477 = vld [vmem:[%s5 + $0x58] sm:$0xff]
  %v478 = vld [vmem:[%s5 + $0x60] sm:$0xff]
  %v479 = vld [vmem:[%s5 + $0x68] sm:$0xff]
  %v480 = vld [vmem:[%s5 + $0x70] sm:$0xff]
  %v481 = vld [vmem:[%s5 + $0x78] sm:$0xff]
  %v482 = vld [vmem:[%s6] sm:$0x1]
  %vm483 = vcmask 523264
  %v485 = vsel %vm483, 0.0, 0
  %487 = vmatprep.subr.mxu0 0.0
  %488 = vmatpush1.msra.mxu0 0.0
  %489 = vmatprep.subr.mxu0 0.0
  %490 = vmatpush1.msra.mxu0 0.0
  %491 = vmatprep.subr.mxu0 0.0
  %492 = vmatpush1.msra.mxu0 0.0
  %493 = vmatprep.subr.mxu0 0.0
  %494 = vmatpush1.msra.mxu0 0.0
  %495 = vmatprep.subr.mxu0 0.0
  %496 = vmatpush1.msra.mxu0 0.0
  %497 = vmatprep.subr.mxu0 0.0
  %498 = vmatpush1.msra.mxu0 0.0
  %499 = vmatprep.subr.mxu0 0.0
  %500 = vmatpush1.msra.mxu0 0.0
  %501 = vmatprep.subr.mxu0 0.0
  %502 = vmatpush1.msra.mxu0 0.0
  %503 = vmatprep.subr.mxu0 %v481
  %504 = vmatpush1.msra.mxu0 %v480
  %505 = vmatprep.subr.mxu0 %v479
  %506 = vmatpush1.msra.mxu0 %v478
  %507 = vmatprep.subr.mxu0 %v477
  %508 = vmatpush1.msra.mxu0 %v476
  %509 = vmatprep.subr.mxu0 %v475
  %510 = vmatpush1.msra.mxu0 %v474
  %511 = vmatprep.subr.mxu0 %v473
  %512 = vmatpush1.msra.mxu0 %v472
  %513 = vmatprep.subr.mxu0 %v471
  %514 = vmatpush1.msra.mxu0 %v470
  %515 = vmatprep.subr.mxu0 %v469
  %516 = vmatpush1.msra.mxu0 %v468
  %517 = vmatprep.subr.mxu0 %v467
  %518 = vmatpush1.msra.mxu0 %v466
  %519 = vmatprep.subr.mxu0 0.0
  %520 = vmatpush2.msra.mxu0 0.0
  %521 = vmatprep.subr.mxu0 0.0
  %522 = vmatpush2.msra.mxu0 0.0
  %523 = vmatprep.subr.mxu0 0.0
  %524 = vmatpush2.msra.mxu0 0.0
  %525 = vmatprep.subr.mxu0 0.0
  %526 = vmatpush2.msra.mxu0 0.0
  %527 = vmatprep.subr.mxu0 0.0
  %528 = vmatpush2.msra.mxu0 0.0
  %529 = vmatprep.subr.mxu0 0.0
  %530 = vmatpush2.msra.mxu0 0.0
  %531 = vmatprep.subr.mxu0 0.0
  %532 = vmatpush2.msra.mxu0 0.0
  %533 = vmatprep.subr.mxu0 0.0
  %534 = vmatpush2.msra.mxu0 0.0
  %535 = vmatprep.subr.mxu0 0.0
  %536 = vmatpush2.msra.mxu0 0.0
  %537 = vmatprep.subr.mxu0 0.0
  %538 = vmatpush2.msra.mxu0 0.0
  %539 = vmatprep.subr.mxu0 0.0
  %540 = vmatpush2.msra.mxu0 0.0
  %541 = vmatprep.subr.mxu0 0.0
  %542 = vmatpush2.msra.mxu0 0.0
  %543 = vmatprep.subr.mxu0 0.0
  %544 = vmatpush2.msra.mxu0 0.0
  %545 = vmatprep.subr.mxu0 0.0
  %546 = vmatpush2.msra.mxu0 0.0
  %547 = vmatprep.subr.mxu0 0.0
  %548 = vmatpush2.msra.mxu0 0.0
  %549 = vmatprep.subr.mxu0 0.0
  %550 = vmatpush2.msra.mxu0 0.0
  %551 = vmatprep.mubr.f32.mxu0 0.0
  %552 = vmatmul.mubr.f32.gmra.mxu0 %v485
  %v553 = vpop.f32.mrf.mxu0
  %v554 = vadd.f32 0.0, %v553
  %v555 = vpop.f32.mrf.mxu0
  %v556 = vadd.f32 0.0, %v555
  %557 = vdwg.mxu0
  %v558 = vadd.f32 %v450, %v554
  %v559 = vxor.u32 %v558, 2147483648
  %v560 = vmul.f32 %v559, 1.442695
  %v561 = vpow.pop %v560
  %v562 = vadd.f32 %v561, 1.0
  %v563 = vrcp.pop %v562
  %v564 = vmul.f32 1.0, %v563
  %v566 = vlaneseq
  %v567 = vshrl.u32 %v566, 7
  %v568 = vsub.s32 0, %v567
  %v569 = vrot.slane %v482, %v568
  %v571 = vadd.f32 %v556, %v569
  %v572 = vmul.f32 %v564, %v571
  %v573 = vadd.f32 %v451, %v572
  %v574 = vtanh.pop %v573
  %v575 = vsub.f32 1.0, %v564
  %577 = vrot.lane.b32.xlu0 %v574, 64
  %v578 = vpop.permute.xlu0 %577
  %v580 = vmul.f32 %v575, %v578
  %v581 = vmul.f32 %v564, 0.0
  %v582 = vadd.f32 %v580, %v581
  %584 = vrot.lane.b32.xlu0 %v582, 64
  %v585 = vpop.permute.xlu0 %584
  %v586 = vsel %vm483, %v585, 0
  %588 = vmatprep.subr.mxu0 0.0
  %589 = vmatpush1.msra.mxu0 0.0
  %590 = vmatprep.subr.mxu0 0.0
  %591 = vmatpush1.msra.mxu0 0.0
  %592 = vmatprep.subr.mxu0 0.0
  %593 = vmatpush1.msra.mxu0 0.0
  %594 = vmatprep.subr.mxu0 0.0
  %595 = vmatpush1.msra.mxu0 0.0
  %596 = vmatprep.subr.mxu0 0.0
  %597 = vmatpush1.msra.mxu0 0.0
  %598 = vmatprep.subr.mxu0 0.0
  %599 = vmatpush1.msra.mxu0 0.0
  %600 = vmatprep.subr.mxu0 0.0
  %601 = vmatpush1.msra.mxu0 0.0
  %602 = vmatprep.subr.mxu0 0.0
  %603 = vmatpush1.msra.mxu0 0.0
  %604 = vmatprep.subr.mxu0 %v481
  %605 = vmatpush1.msra.mxu0 %v480
  %606 = vmatprep.subr.mxu0 %v479
  %607 = vmatpush1.msra.mxu0 %v478
  %608 = vmatprep.subr.mxu0 %v477
  %609 = vmatpush1.msra.mxu0 %v476
  %610 = vmatprep.subr.mxu0 %v475
  %611 = vmatpush1.msra.mxu0 %v474
  %612 = vmatprep.subr.mxu0 %v473
  %613 = vmatpush1.msra.mxu0 %v472
  %614 = vmatprep.subr.mxu0 %v471
  %615 = vmatpush1.msra.mxu0 %v470
  %616 = vmatprep.subr.mxu0 %v469
  %617 = vmatpush1.msra.mxu0 %v468
  %618 = vmatprep.subr.mxu0 %v467
  %619 = vmatpush1.msra.mxu0 %v466
  %620 = vmatprep.subr.mxu0 0.0
  %621 = vmatpush2.msra.mxu0 0.0
  %622 = vmatprep.subr.mxu0 0.0
  %623 = vmatpush2.msra.mxu0 0.0
  %624 = vmatprep.subr.mxu0 0.0
  %625 = vmatpush2.msra.mxu0 0.0
  %626 = vmatprep.subr.mxu0 0.0
  %627 = vmatpush2.msra.mxu0 0.0
  %628 = vmatprep.subr.mxu0 0.0
  %629 = vmatpush2.msra.mxu0 0.0
  %630 = vmatprep.subr.mxu0 0.0
  %631 = vmatpush2.msra.mxu0 0.0
  %632 = vmatprep.subr.mxu0 0.0
  %633 = vmatpush2.msra.mxu0 0.0
  %634 = vmatprep.subr.mxu0 0.0
  %635 = vmatpush2.msra.mxu0 0.0
  %636 = vmatprep.subr.mxu0 0.0
  %637 = vmatpush2.msra.mxu0 0.0
  %638 = vmatprep.subr.mxu0 0.0
  %639 = vmatpush2.msra.mxu0 0.0
  %640 = vmatprep.subr.mxu0 0.0
  %641 = vmatpush2.msra.mxu0 0.0
  %642 = vmatprep.subr.mxu0 0.0
  %643 = vmatpush2.msra.mxu0 0.0
  %644 = vmatprep.subr.mxu0 0.0
  %645 = vmatpush2.msra.mxu0 0.0
  %646 = vmatprep.subr.mxu0 0.0
  %647 = vmatpush2.msra.mxu0 0.0
  %648 = vmatprep.subr.mxu0 0.0
  %649 = vmatpush2.msra.mxu0 0.0
  %650 = vmatprep.subr.mxu0 0.0
  %651 = vmatpush2.msra.mxu0 0.0
  %652 = vmatprep.mubr.f32.mxu0 0.0
  %653 = vmatmul.mubr.f32.gmra.mxu0 %v586
  %v654 = vpop.f32.mrf.mxu0
  %v655 = vadd.f32 0.0, %v654
  %v656 = vpop.f32.mrf.mxu0
  %v657 = vadd.f32 0.0, %v656
  %658 = vdwg.mxu0
  %v659 = vadd.f32 %v452, %v655
  %v660 = vxor.u32 %v659, 2147483648
  %v661 = vmul.f32 %v660, 1.442695
  %v662 = vpow.pop %v661
  %v663 = vadd.f32 %v662, 1.0
  %v664 = vrcp.pop %v663
  %v665 = vmul.f32 1.0, %v664
  %v666 = vadd.f32 %v657, %v569
  %v667 = vmul.f32 %v665, %v666
  %v668 = vadd.f32 %v453, %v667
  %v669 = vtanh.pop %v668
  %v670 = vsub.f32 1.0, %v665
  %672 = vrot.lane.b32.xlu0 %v669, 64
  %v673 = vpop.permute.xlu0 %672
  %v675 = vmul.f32 %v670, %v673
  %v676 = vmul.f32 %v665, %v582
  %v677 = vadd.f32 %v675, %v676
  %679 = vrot.lane.b32.xlu0 %v677, 64
  %v680 = vpop.permute.xlu0 %679
  %v681 = vsel %vm483, %v680, 0
  %683 = vmatprep.subr.mxu0 0.0
  %684 = vmatpush1.msra.mxu0 0.0
  %685 = vmatprep.subr.mxu0 0.0
  %686 = vmatpush1.msra.mxu0 0.0
  %687 = vmatprep.subr.mxu0 0.0
  %688 = vmatpush1.msra.mxu0 0.0
  %689 = vmatprep.subr.mxu0 0.0
  %690 = vmatpush1.msra.mxu0 0.0
  %691 = vmatprep.subr.mxu0 0.0
  %692 = vmatpush1.msra.mxu0 0.0
  %693 = vmatprep.subr.mxu0 0.0
  %694 = vmatpush1.msra.mxu0 0.0
  %695 = vmatprep.subr.mxu0 0.0
  %696 = vmatpush1.msra.mxu0 0.0
  %697 = vmatprep.subr.mxu0 0.0
  %698 = vmatpush1.msra.mxu0 0.0
  %699 = vmatprep.subr.mxu0 %v481
  %700 = vmatpush1.msra.mxu0 %v480
  %701 = vmatprep.subr.mxu0 %v479
  %702 = vmatpush1.msra.mxu0 %v478
  %703 = vmatprep.subr.mxu0 %v477
  %704 = vmatpush1.msra.mxu0 %v476
  %705 = vmatprep.subr.mxu0 %v475
  %706 = vmatpush1.msra.mxu0 %v474
  %707 = vmatprep.subr.mxu0 %v473
  %708 = vmatpush1.msra.mxu0 %v472
  %709 = vmatprep.subr.mxu0 %v471
  %710 = vmatpush1.msra.mxu0 %v470
  %711 = vmatprep.subr.mxu0 %v469
  %712 = vmatpush1.msra.mxu0 %v468
  %713 = vmatprep.subr.mxu0 %v467
  %714 = vmatpush1.msra.mxu0 %v466
  %715 = vmatprep.subr.mxu0 0.0
  %716 = vmatpush2.msra.mxu0 0.0
  %717 = vmatprep.subr.mxu0 0.0
  %718 = vmatpush2.msra.mxu0 0.0
  %719 = vmatprep.subr.mxu0 0.0
  %720 = vmatpush2.msra.mxu0 0.0
  %721 = vmatprep.subr.mxu0 0.0
  %722 = vmatpush2.msra.mxu0 0.0
  %723 = vmatprep.subr.mxu0 0.0
  %724 = vmatpush2.msra.mxu0 0.0
  %725 = vmatprep.subr.mxu0 0.0
  %726 = vmatpush2.msra.mxu0 0.0
  %727 = vmatprep.subr.mxu0 0.0
  %728 = vmatpush2.msra.mxu0 0.0
  %729 = vmatprep.subr.mxu0 0.0
  %730 = vmatpush2.msra.mxu0 0.0
  %731 = vmatprep.subr.mxu0 0.0
  %732 = vmatpush2.msra.mxu0 0.0
  %733 = vmatprep.subr.mxu0 0.0
  %734 = vmatpush2.msra.mxu0 0.0
  %735 = vmatprep.subr.mxu0 0.0
  %736 = vmatpush2.msra.mxu0 0.0
  %737 = vmatprep.subr.mxu0 0.0
  %738 = vmatpush2.msra.mxu0 0.0
  %739 = vmatprep.subr.mxu0 0.0
  %740 = vmatpush2.msra.mxu0 0.0
  %741 = vmatprep.subr.mxu0 0.0
  %742 = vmatpush2.msra.mxu0 0.0
  %743 = vmatprep.subr.mxu0 0.0
  %744 = vmatpush2.msra.mxu0 0.0
  %745 = vmatprep.subr.mxu0 0.0
  %746 = vmatpush2.msra.mxu0 0.0
  %747 = vmatprep.mubr.f32.mxu0 0.0
  %748 = vmatmul.mubr.f32.gmra.mxu0 %v681
  %v749 = vpop.f32.mrf.mxu0
  %v750 = vadd.f32 0.0, %v749
  %v751 = vpop.f32.mrf.mxu0
  %v752 = vadd.f32 0.0, %v751
  %753 = vdwg.mxu0
  %v754 = vadd.f32 %v454, %v750
  %v755 = vxor.u32 %v754, 2147483648
  %v756 = vmul.f32 %v755, 1.442695
  %v757 = vpow.pop %v756
  %v758 = vadd.f32 %v757, 1.0
  %v759 = vrcp.pop %v758
  %v760 = vmul.f32 1.0, %v759
  %v761 = vadd.f32 %v752, %v569
  %v762 = vmul.f32 %v760, %v761
  %v763 = vadd.f32 %v455, %v762
  %v764 = vtanh.pop %v763
  %v765 = vsub.f32 1.0, %v760
  %767 = vrot.lane.b32.xlu0 %v764, 64
  %v768 = vpop.permute.xlu0 %767
  %v770 = vmul.f32 %v765, %v768
  %v771 = vmul.f32 %v760, %v677
  %v772 = vadd.f32 %v770, %v771
  %774 = vrot.lane.b32.xlu0 %v772, 64
  %v775 = vpop.permute.xlu0 %774
  %v776 = vsel %vm483, %v775, 0
  %778 = vmatprep.subr.mxu0 0.0
  %779 = vmatpush1.msra.mxu0 0.0
  %780 = vmatprep.subr.mxu0 0.0
  %781 = vmatpush1.msra.mxu0 0.0
  %782 = vmatprep.subr.mxu0 0.0
  %783 = vmatpush1.msra.mxu0 0.0
  %784 = vmatprep.subr.mxu0 0.0
  %785 = vmatpush1.msra.mxu0 0.0
  %786 = vmatprep.subr.mxu0 0.0
  %787 = vmatpush1.msra.mxu0 0.0
  %788 = vmatprep.subr.mxu0 0.0
  %789 = vmatpush1.msra.mxu0 0.0
  %790 = vmatprep.subr.mxu0 0.0
  %791 = vmatpush1.msra.mxu0 0.0
  %792 = vmatprep.subr.mxu0 0.0
  %793 = vmatpush1.msra.mxu0 0.0
  %794 = vmatprep.subr.mxu0 %v481
  %795 = vmatpush1.msra.mxu0 %v480
  %796 = vmatprep.subr.mxu0 %v479
  %797 = vmatpush1.msra.mxu0 %v478
  %798 = vmatprep.subr.mxu0 %v477
  %799 = vmatpush1.msra.mxu0 %v476
  %800 = vmatprep.subr.mxu0 %v475
  %801 = vmatpush1.msra.mxu0 %v474
  %802 = vmatprep.subr.mxu0 %v473
  %803 = vmatpush1.msra.mxu0 %v472
  %804 = vmatprep.subr.mxu0 %v471
  %805 = vmatpush1.msra.mxu0 %v470
  %806 = vmatprep.subr.mxu0 %v469
  %807 = vmatpush1.msra.mxu0 %v468
  %808 = vmatprep.subr.mxu0 %v467
  %809 = vmatpush1.msra.mxu0 %v466
  %810 = vmatprep.subr.mxu0 0.0
  %811 = vmatpush2.msra.mxu0 0.0
  %812 = vmatprep.subr.mxu0 0.0
  %813 = vmatpush2.msra.mxu0 0.0
  %814 = vmatprep.subr.mxu0 0.0
  %815 = vmatpush2.msra.mxu0 0.0
  %816 = vmatprep.subr.mxu0 0.0
  %817 = vmatpush2.msra.mxu0 0.0
  %818 = vmatprep.subr.mxu0 0.0
  %819 = vmatpush2.msra.mxu0 0.0
  %820 = vmatprep.subr.mxu0 0.0
  %821 = vmatpush2.msra.mxu0 0.0
  %822 = vmatprep.subr.mxu0 0.0
  %823 = vmatpush2.msra.mxu0 0.0
  %824 = vmatprep.subr.mxu0 0.0
  %825 = vmatpush2.msra.mxu0 0.0
  %826 = vmatprep.subr.mxu0 0.0
  %827 = vmatpush2.msra.mxu0 0.0
  %828 = vmatprep.subr.mxu0 0.0
  %829 = vmatpush2.msra.mxu0 0.0
  %830 = vmatprep.subr.mxu0 0.0
  %831 = vmatpush2.msra.mxu0 0.0
  %832 = vmatprep.subr.mxu0 0.0
  %833 = vmatpush2.msra.mxu0 0.0
  %834 = vmatprep.subr.mxu0 0.0
  %835 = vmatpush2.msra.mxu0 0.0
  %836 = vmatprep.subr.mxu0 0.0
  %837 = vmatpush2.msra.mxu0 0.0
  %838 = vmatprep.subr.mxu0 0.0
  %839 = vmatpush2.msra.mxu0 0.0
  %840 = vmatprep.subr.mxu0 0.0
  %841 = vmatpush2.msra.mxu0 0.0
  %842 = vmatprep.mubr.f32.mxu0 0.0
  %843 = vmatmul.mubr.f32.gmra.mxu0 %v776
  %v844 = vpop.f32.mrf.mxu0
  %v845 = vadd.f32 0.0, %v844
  %v846 = vpop.f32.mrf.mxu0
  %v847 = vadd.f32 0.0, %v846
  %848 = vdwg.mxu0
  %v849 = vadd.f32 %v456, %v845
  %v850 = vxor.u32 %v849, 2147483648
  %v851 = vmul.f32 %v850, 1.442695
  %v852 = vpow.pop %v851
  %v853 = vadd.f32 %v852, 1.0
  %v854 = vrcp.pop %v853
  %v855 = vmul.f32 1.0, %v854
  %v856 = vadd.f32 %v847, %v569
  %v857 = vmul.f32 %v855, %v856
  %v858 = vadd.f32 %v457, %v857
  %v859 = vtanh.pop %v858
  %v860 = vsub.f32 1.0, %v855
  %862 = vrot.lane.b32.xlu0 %v859, 64
  %v863 = vpop.permute.xlu0 %862
  %v865 = vmul.f32 %v860, %v863
  %v866 = vmul.f32 %v855, %v772
  %v867 = vadd.f32 %v865, %v866
  %869 = vrot.lane.b32.xlu0 %v867, 64
  %v870 = vpop.permute.xlu0 %869
  %v871 = vsel %vm483, %v870, 0
  %873 = vmatprep.subr.mxu0 0.0
  %874 = vmatpush1.msra.mxu0 0.0
  %875 = vmatprep.subr.mxu0 0.0
  %876 = vmatpush1.msra.mxu0 0.0
  %877 = vmatprep.subr.mxu0 0.0
  %878 = vmatpush1.msra.mxu0 0.0
  %879 = vmatprep.subr.mxu0 0.0
  %880 = vmatpush1.msra.mxu0 0.0
  %881 = vmatprep.subr.mxu0 0.0
  %882 = vmatpush1.msra.mxu0 0.0
  %883 = vmatprep.subr.mxu0 0.0
  %884 = vmatpush1.msra.mxu0 0.0
  %885 = vmatprep.subr.mxu0 0.0
  %886 = vmatpush1.msra.mxu0 0.0
  %887 = vmatprep.subr.mxu0 0.0
  %888 = vmatpush1.msra.mxu0 0.0
  %889 = vmatprep.subr.mxu0 %v481
  %890 = vmatpush1.msra.mxu0 %v480
  %891 = vmatprep.subr.mxu0 %v479
  %892 = vmatpush1.msra.mxu0 %v478
  %893 = vmatprep.subr.mxu0 %v477
  %894 = vmatpush1.msra.mxu0 %v476
  %895 = vmatprep.subr.mxu0 %v475
  %896 = vmatpush1.msra.mxu0 %v474
  %897 = vmatprep.subr.mxu0 %v473
  %898 = vmatpush1.msra.mxu0 %v472
  %899 = vmatprep.subr.mxu0 %v471
  %900 = vmatpush1.msra.mxu0 %v470
  %901 = vmatprep.subr.mxu0 %v469
  %902 = vmatpush1.msra.mxu0 %v468
  %903 = vmatprep.subr.mxu0 %v467
  %904 = vmatpush1.msra.mxu0 %v466
  %905 = vmatprep.subr.mxu0 0.0
  %906 = vmatpush2.msra.mxu0 0.0
  %907 = vmatprep.subr.mxu0 0.0
  %908 = vmatpush2.msra.mxu0 0.0
  %909 = vmatprep.subr.mxu0 0.0
  %910 = vmatpush2.msra.mxu0 0.0
  %911 = vmatprep.subr.mxu0 0.0
  %912 = vmatpush2.msra.mxu0 0.0
  %913 = vmatprep.subr.mxu0 0.0
  %914 = vmatpush2.msra.mxu0 0.0
  %915 = vmatprep.subr.mxu0 0.0
  %916 = vmatpush2.msra.mxu0 0.0
  %917 = vmatprep.subr.mxu0 0.0
  %918 = vmatpush2.msra.mxu0 0.0
  %919 = vmatprep.subr.mxu0 0.0
  %920 = vmatpush2.msra.mxu0 0.0
  %921 = vmatprep.subr.mxu0 0.0
  %922 = vmatpush2.msra.mxu0 0.0
  %923 = vmatprep.subr.mxu0 0.0
  %924 = vmatpush2.msra.mxu0 0.0
  %925 = vmatprep.subr.mxu0 0.0
  %926 = vmatpush2.msra.mxu0 0.0
  %927 = vmatprep.subr.mxu0 0.0
  %928 = vmatpush2.msra.mxu0 0.0
  %929 = vmatprep.subr.mxu0 0.0
  %930 = vmatpush2.msra.mxu0 0.0
  %931 = vmatprep.subr.mxu0 0.0
  %932 = vmatpush2.msra.mxu0 0.0
  %933 = vmatprep.subr.mxu0 0.0
  %934 = vmatpush2.msra.mxu0 0.0
  %935 = vmatprep.subr.mxu0 0.0
  %936 = vmatpush2.msra.mxu0 0.0
  %937 = vmatprep.mubr.f32.mxu0 0.0
  %938 = vmatmul.mubr.f32.gmra.mxu0 %v871
  %v939 = vpop.f32.mrf.mxu0
  %v940 = vadd.f32 0.0, %v939
  %v941 = vpop.f32.mrf.mxu0
  %v942 = vadd.f32 0.0, %v941
  %943 = vdwg.mxu0
  %v944 = vadd.f32 %v458, %v940
  %v945 = vxor.u32 %v944, 2147483648
  %v946 = vmul.f32 %v945, 1.442695
  %v947 = vpow.pop %v946
  %v948 = vadd.f32 %v947, 1.0
  %v949 = vrcp.pop %v948
  %v950 = vmul.f32 1.0, %v949
  %v951 = vadd.f32 %v942, %v569
  %v952 = vmul.f32 %v950, %v951
  %v953 = vadd.f32 %v459, %v952
  %v954 = vtanh.pop %v953
  %v955 = vsub.f32 1.0, %v950
  %957 = vrot.lane.b32.xlu0 %v954, 64
  %v958 = vpop.permute.xlu0 %957
  %v960 = vmul.f32 %v955, %v958
  %v961 = vmul.f32 %v950, %v867
  %v962 = vadd.f32 %v960, %v961
  %964 = vrot.lane.b32.xlu0 %v962, 64
  %v965 = vpop.permute.xlu0 %964
  %v966 = vsel %vm483, %v965, 0
  %968 = vmatprep.subr.mxu0 0.0
  %969 = vmatpush1.msra.mxu0 0.0
  %970 = vmatprep.subr.mxu0 0.0
  %971 = vmatpush1.msra.mxu0 0.0
  %972 = vmatprep.subr.mxu0 0.0
  %973 = vmatpush1.msra.mxu0 0.0
  %974 = vmatprep.subr.mxu0 0.0
  %975 = vmatpush1.msra.mxu0 0.0
  %976 = vmatprep.subr.mxu0 0.0
  %977 = vmatpush1.msra.mxu0 0.0
  %978 = vmatprep.subr.mxu0 0.0
  %979 = vmatpush1.msra.mxu0 0.0
  %980 = vmatprep.subr.mxu0 0.0
  %981 = vmatpush1.msra.mxu0 0.0
  %982 = vmatprep.subr.mxu0 0.0
  %983 = vmatpush1.msra.mxu0 0.0
  %984 = vmatprep.subr.mxu0 %v481
  %985 = vmatpush1.msra.mxu0 %v480
  %986 = vmatprep.subr.mxu0 %v479
  %987 = vmatpush1.msra.mxu0 %v478
  %988 = vmatprep.subr.mxu0 %v477
  %989 = vmatpush1.msra.mxu0 %v476
  %990 = vmatprep.subr.mxu0 %v475
  %991 = vmatpush1.msra.mxu0 %v474
  %992 = vmatprep.subr.mxu0 %v473
  %993 = vmatpush1.msra.mxu0 %v472
  %994 = vmatprep.subr.mxu0 %v471
  %995 = vmatpush1.msra.mxu0 %v470
  %996 = vmatprep.subr.mxu0 %v469
  %997 = vmatpush1.msra.mxu0 %v468
  %998 = vmatprep.subr.mxu0 %v467
  %999 = vmatpush1.msra.mxu0 %v466
  %1000 = vmatprep.subr.mxu0 0.0
  %1001 = vmatpush2.msra.mxu0 0.0
  %1002 = vmatprep.subr.mxu0 0.0
  %1003 = vmatpush2.msra.mxu0 0.0
  %1004 = vmatprep.subr.mxu0 0.0
  %1005 = vmatpush2.msra.mxu0 0.0
  %1006 = vmatprep.subr.mxu0 0.0
  %1007 = vmatpush2.msra.mxu0 0.0
  %1008 = vmatprep.subr.mxu0 0.0
  %1009 = vmatpush2.msra.mxu0 0.0
  %1010 = vmatprep.subr.mxu0 0.0
  %1011 = vmatpush2.msra.mxu0 0.0
  %1012 = vmatprep.subr.mxu0 0.0
  %1013 = vmatpush2.msra.mxu0 0.0
  %1014 = vmatprep.subr.mxu0 0.0
  %1015 = vmatpush2.msra.mxu0 0.0
  %1016 = vmatprep.subr.mxu0 0.0
  %1017 = vmatpush2.msra.mxu0 0.0
  %1018 = vmatprep.subr.mxu0 0.0
  %1019 = vmatpush2.msra.mxu0 0.0
  %1020 = vmatprep.subr.mxu0 0.0
  %1021 = vmatpush2.msra.mxu0 0.0
  %1022 = vmatprep.subr.mxu0 0.0
  %1023 = vmatpush2.msra.mxu0 0.0
  %1024 = vmatprep.subr.mxu0 0.0
  %1025 = vmatpush2.msra.mxu0 0.0
  %1026 = vmatprep.subr.mxu0 0.0
  %1027 = vmatpush2.msra.mxu0 0.0
  %1028 = vmatprep.subr.mxu0 0.0
  %1029 = vmatpush2.msra.mxu0 0.0
  %1030 = vmatprep.subr.mxu0 0.0
  %1031 = vmatpush2.msra.mxu0 0.0
  %1032 = vmatprep.mubr.f32.mxu0 0.0
  %1033 = vmatmul.mubr.f32.gmra.mxu0 %v966
  %v1034 = vpop.f32.mrf.mxu0
  %v1035 = vadd.f32 0.0, %v1034
  %v1036 = vpop.f32.mrf.mxu0
  %v1037 = vadd.f32 0.0, %v1036
  %1038 = vdwg.mxu0
  %v1039 = vadd.f32 %v460, %v1035
  %v1040 = vxor.u32 %v1039, 2147483648
  %v1041 = vmul.f32 %v1040, 1.442695
  %v1042 = vpow.pop %v1041
  %v1043 = vadd.f32 %v1042, 1.0
  %v1044 = vrcp.pop %v1043
  %v1045 = vmul.f32 1.0, %v1044
  %v1046 = vadd.f32 %v1037, %v569
  %v1047 = vmul.f32 %v1045, %v1046
  %v1048 = vadd.f32 %v461, %v1047
  %v1049 = vtanh.pop %v1048
  %v1050 = vsub.f32 1.0, %v1045
  %1052 = vrot.lane.b32.xlu0 %v1049, 64
  %v1053 = vpop.permute.xlu0 %1052
  %v1055 = vmul.f32 %v1050, %v1053
  %v1056 = vmul.f32 %v1045, %v962
  %v1057 = vadd.f32 %v1055, %v1056
  %1059 = vrot.lane.b32.xlu0 %v1057, 64
  %v1060 = vpop.permute.xlu0 %1059
  %v1061 = vsel %vm483, %v1060, 0
  %1063 = vmatprep.subr.mxu0 0.0
  %1064 = vmatpush1.msra.mxu0 0.0
  %1065 = vmatprep.subr.mxu0 0.0
  %1066 = vmatpush1.msra.mxu0 0.0
  %1067 = vmatprep.subr.mxu0 0.0
  %1068 = vmatpush1.msra.mxu0 0.0
  %1069 = vmatprep.subr.mxu0 0.0
  %1070 = vmatpush1.msra.mxu0 0.0
  %1071 = vmatprep.subr.mxu0 0.0
  %1072 = vmatpush1.msra.mxu0 0.0
  %1073 = vmatprep.subr.mxu0 0.0
  %1074 = vmatpush1.msra.mxu0 0.0
  %1075 = vmatprep.subr.mxu0 0.0
  %1076 = vmatpush1.msra.mxu0 0.0
  %1077 = vmatprep.subr.mxu0 0.0
  %1078 = vmatpush1.msra.mxu0 0.0
  %1079 = vmatprep.subr.mxu0 %v481
  %1080 = vmatpush1.msra.mxu0 %v480
  %1081 = vmatprep.subr.mxu0 %v479
  %1082 = vmatpush1.msra.mxu0 %v478
  %1083 = vmatprep.subr.mxu0 %v477
  %1084 = vmatpush1.msra.mxu0 %v476
  %1085 = vmatprep.subr.mxu0 %v475
  %1086 = vmatpush1.msra.mxu0 %v474
  %1087 = vmatprep.subr.mxu0 %v473
  %1088 = vmatpush1.msra.mxu0 %v472
  %1089 = vmatprep.subr.mxu0 %v471
  %1090 = vmatpush1.msra.mxu0 %v470
  %1091 = vmatprep.subr.mxu0 %v469
  %1092 = vmatpush1.msra.mxu0 %v468
  %1093 = vmatprep.subr.mxu0 %v467
  %1094 = vmatpush1.msra.mxu0 %v466
  %1095 = vmatprep.subr.mxu0 0.0
  %1096 = vmatpush2.msra.mxu0 0.0
  %1097 = vmatprep.subr.mxu0 0.0
  %1098 = vmatpush2.msra.mxu0 0.0
  %1099 = vmatprep.subr.mxu0 0.0
  %1100 = vmatpush2.msra.mxu0 0.0
  %1101 = vmatprep.subr.mxu0 0.0
  %1102 = vmatpush2.msra.mxu0 0.0
  %1103 = vmatprep.subr.mxu0 0.0
  %1104 = vmatpush2.msra.mxu0 0.0
  %1105 = vmatprep.subr.mxu0 0.0
  %1106 = vmatpush2.msra.mxu0 0.0
  %1107 = vmatprep.subr.mxu0 0.0
  %1108 = vmatpush2.msra.mxu0 0.0
  %1109 = vmatprep.subr.mxu0 0.0
  %1110 = vmatpush2.msra.mxu0 0.0
  %1111 = vmatprep.subr.mxu0 0.0
  %1112 = vmatpush2.msra.mxu0 0.0
  %1113 = vmatprep.subr.mxu0 0.0
  %1114 = vmatpush2.msra.mxu0 0.0
  %1115 = vmatprep.subr.mxu0 0.0
  %1116 = vmatpush2.msra.mxu0 0.0
  %1117 = vmatprep.subr.mxu0 0.0
  %1118 = vmatpush2.msra.mxu0 0.0
  %1119 = vmatprep.subr.mxu0 0.0
  %1120 = vmatpush2.msra.mxu0 0.0
  %1121 = vmatprep.subr.mxu0 0.0
  %1122 = vmatpush2.msra.mxu0 0.0
  %1123 = vmatprep.subr.mxu0 0.0
  %1124 = vmatpush2.msra.mxu0 0.0
  %1125 = vmatprep.subr.mxu0 0.0
  %1126 = vmatpush2.msra.mxu0 0.0
  %1127 = vmatprep.mubr.f32.mxu0 0.0
  %1128 = vmatmul.mubr.f32.gmra.mxu0 %v1061
  %v1129 = vpop.f32.mrf.mxu0
  %v1130 = vadd.f32 0.0, %v1129
  %v1131 = vpop.f32.mrf.mxu0
  %v1132 = vadd.f32 0.0, %v1131
  %1133 = vdwg.mxu0
  %v1134 = vadd.f32 %v462, %v1130
  %v1135 = vxor.u32 %v1134, 2147483648
  %v1136 = vmul.f32 %v1135, 1.442695
  %v1137 = vpow.pop %v1136
  %v1138 = vadd.f32 %v1137, 1.0
  %v1139 = vrcp.pop %v1138
  %v1140 = vmul.f32 1.0, %v1139
  %v1141 = vadd.f32 %v1132, %v569
  %v1142 = vmul.f32 %v1140, %v1141
  %v1143 = vadd.f32 %v463, %v1142
  %v1144 = vtanh.pop %v1143
  %v1145 = vsub.f32 1.0, %v1140
  %1147 = vrot.lane.b32.xlu0 %v1144, 64
  %v1148 = vpop.permute.xlu0 %1147
  %v1150 = vmul.f32 %v1145, %v1148
  %v1151 = vmul.f32 %v1140, %v1057
  %v1152 = vadd.f32 %v1150, %v1151
  %1154 = vrot.lane.b32.xlu0 %v1152, 64
  %v1155 = vpop.permute.xlu0 %1154
  %v1156 = vsel %vm483, %v1155, 0
  %1158 = vmatprep.subr.mxu0 0.0
  %1159 = vmatpush1.msra.mxu0 0.0
  %1160 = vmatprep.subr.mxu0 0.0
  %1161 = vmatpush1.msra.mxu0 0.0
  %1162 = vmatprep.subr.mxu0 0.0
  %1163 = vmatpush1.msra.mxu0 0.0
  %1164 = vmatprep.subr.mxu0 0.0
  %1165 = vmatpush1.msra.mxu0 0.0
  %1166 = vmatprep.subr.mxu0 0.0
  %1167 = vmatpush1.msra.mxu0 0.0
  %1168 = vmatprep.subr.mxu0 0.0
  %1169 = vmatpush1.msra.mxu0 0.0
  %1170 = vmatprep.subr.mxu0 0.0
  %1171 = vmatpush1.msra.mxu0 0.0
  %1172 = vmatprep.subr.mxu0 0.0
  %1173 = vmatpush1.msra.mxu0 0.0
  %1174 = vmatprep.subr.mxu0 %v481
  %1175 = vmatpush1.msra.mxu0 %v480
  %1176 = vmatprep.subr.mxu0 %v479
  %1177 = vmatpush1.msra.mxu0 %v478
  %1178 = vmatprep.subr.mxu0 %v477
  %1179 = vmatpush1.msra.mxu0 %v476
  %1180 = vmatprep.subr.mxu0 %v475
  %1181 = vmatpush1.msra.mxu0 %v474
  %1182 = vmatprep.subr.mxu0 %v473
  %1183 = vmatpush1.msra.mxu0 %v472
  %1184 = vmatprep.subr.mxu0 %v471
  %1185 = vmatpush1.msra.mxu0 %v470
  %1186 = vmatprep.subr.mxu0 %v469
  %1187 = vmatpush1.msra.mxu0 %v468
  %1188 = vmatprep.subr.mxu0 %v467
  %1189 = vmatpush1.msra.mxu0 %v466
  %1190 = vmatprep.subr.mxu0 0.0
  %1191 = vmatpush2.msra.mxu0 0.0
  %1192 = vmatprep.subr.mxu0 0.0
  %1193 = vmatpush2.msra.mxu0 0.0
  %1194 = vmatprep.subr.mxu0 0.0
  %1195 = vmatpush2.msra.mxu0 0.0
  %1196 = vmatprep.subr.mxu0 0.0
  %1197 = vmatpush2.msra.mxu0 0.0
  %1198 = vmatprep.subr.mxu0 0.0
  %1199 = vmatpush2.msra.mxu0 0.0
  %1200 = vmatprep.subr.mxu0 0.0
  %1201 = vmatpush2.msra.mxu0 0.0
  %1202 = vmatprep.subr.mxu0 0.0
  %1203 = vmatpush2.msra.mxu0 0.0
  %1204 = vmatprep.subr.mxu0 0.0
  %1205 = vmatpush2.msra.mxu0 0.0
  %1206 = vmatprep.subr.mxu0 0.0
  %1207 = vmatpush2.msra.mxu0 0.0
  %1208 = vmatprep.subr.mxu0 0.0
  %1209 = vmatpush2.msra.mxu0 0.0
  %1210 = vmatprep.subr.mxu0 0.0
  %1211 = vmatpush2.msra.mxu0 0.0
  %1212 = vmatprep.subr.mxu0 0.0
  %1213 = vmatpush2.msra.mxu0 0.0
  %1214 = vmatprep.subr.mxu0 0.0
  %1215 = vmatpush2.msra.mxu0 0.0
  %1216 = vmatprep.subr.mxu0 0.0
  %1217 = vmatpush2.msra.mxu0 0.0
  %1218 = vmatprep.subr.mxu0 0.0
  %1219 = vmatpush2.msra.mxu0 0.0
  %1220 = vmatprep.subr.mxu0 0.0
  %1221 = vmatpush2.msra.mxu0 0.0
  %1222 = vmatprep.mubr.f32.mxu0 0.0
  %1223 = vmatmul.mubr.f32.gmra.mxu0 %v1156
  %v1224 = vpop.f32.mrf.mxu0
  %v1225 = vadd.f32 0.0, %v1224
  %v1226 = vpop.f32.mrf.mxu0
  %v1227 = vadd.f32 0.0, %v1226
  %1228 = vdwg.mxu0
  %v1229 = vadd.f32 %v464, %v1225
  %v1230 = vxor.u32 %v1229, 2147483648
  %v1231 = vmul.f32 %v1230, 1.442695
  %v1232 = vpow.pop %v1231
  %v1233 = vadd.f32 %v1232, 1.0
  %v1234 = vrcp.pop %v1233
  %v1235 = vmul.f32 1.0, %v1234
  %v1236 = vadd.f32 %v1227, %v569
  %v1237 = vmul.f32 %v1235, %v1236
  %v1238 = vadd.f32 %v465, %v1237
  %v1239 = vtanh.pop %v1238
  %v1240 = vsub.f32 1.0, %v1235
  %1242 = vrot.lane.b32.xlu0 %v1239, 64
  %v1243 = vpop.permute.xlu0 %1242
  %v1245 = vmul.f32 %v1240, %v1243
  %v1246 = vmul.f32 %v1235, %v1152
  %v1247 = vadd.f32 %v1245, %v1246
  %1249 = vrot.lane.b32.xlu0 %v1247, 64
  %v1250 = vpop.permute.xlu0 %1249
  %vm1259 = vcmask 261120
  %v1260 = vsel %vm1259, %v585, %v1250
  %v1261 = vsel %vm1259, %v680, %v1155
  %v1262 = vsel %vm1259, %v775, %v1060
  %v1263 = vsel %vm1259, %v870, %v965
  %v1264 = vsel %vm1259, %v965, %v870
  %v1265 = vsel %vm1259, %v1060, %v775
  %v1266 = vsel %vm1259, %v1155, %v680
  %v1267 = vsel %vm1259, %v1250, %v585
  %1268 = vst.msk [vmem:[%s9] sm:$0xff] %vm483, %v1260
  %1269 = vst.msk [vmem:[%s9 + $0x8] sm:$0xff] %vm483, %v1261
  %1270 = vst.msk [vmem:[%s9 + $0x10] sm:$0xff] %vm483, %v1262
  %1271 = vst.msk [vmem:[%s9 + $0x18] sm:$0xff] %vm483, %v1263
  %1272 = vst.msk [vmem:[%s9 + $0x20] sm:$0xff] %vm483, %v1264
  %1273 = vst.msk [vmem:[%s9 + $0x28] sm:$0xff] %vm483, %v1265
  %1274 = vst.msk [vmem:[%s9 + $0x30] sm:$0xff] %vm483, %v1266
  %1275 = vst.msk [vmem:[%s9 + $0x38] sm:$0xff] %vm483, %v1267
  %v1276 = vld [vmem:[%s7] sm:$0xff]
  %v1277 = vld [vmem:[%s7 + $0x8] sm:$0xff]
  %v1278 = vld [vmem:[%s7 + $0x10] sm:$0xff]
  %v1279 = vld [vmem:[%s7 + $0x18] sm:$0xff]
  %v1280 = vld [vmem:[%s7 + $0x20] sm:$0xff]
  %v1281 = vld [vmem:[%s7 + $0x28] sm:$0xff]
  %v1282 = vld [vmem:[%s7 + $0x30] sm:$0xff]
  %v1283 = vld [vmem:[%s7 + $0x38] sm:$0xff]
  %v1284 = vld [vmem:[%s8] sm:$0x1]
  %v1286 = vlaneseq
  %v1287 = vshrl.u32 %v1286, 7
  %v1288 = vsub.s32 0, %v1287
  %v1289 = vrot.slane %v1284, %v1288
  %v1291 = vsel %vm483, %v1250, 0
  %1293 = vmatprep.subr.mxu0 0.0
  %1294 = vmatpush1.msra.mxu0 0.0
  %1295 = vmatprep.subr.mxu0 0.0
  %1296 = vmatpush1.msra.mxu0 0.0
  %1297 = vmatprep.subr.mxu0 0.0
  %1298 = vmatpush1.msra.mxu0 0.0
  %1299 = vmatprep.subr.mxu0 0.0
  %1300 = vmatpush1.msra.mxu0 0.0
  %1301 = vmatprep.subr.mxu0 0.0
  %1302 = vmatpush1.msra.mxu0 0.0
  %1303 = vmatprep.subr.mxu0 0.0
  %1304 = vmatpush1.msra.mxu0 0.0
  %1305 = vmatprep.subr.mxu0 0.0
  %1306 = vmatpush1.msra.mxu0 0.0
  %1307 = vmatprep.subr.mxu0 0.0
  %1308 = vmatpush1.msra.mxu0 0.0
  %1309 = vmatprep.subr.mxu0 0.0
  %1310 = vmatpush1.msra.mxu0 %v1283
  %1311 = vmatprep.subr.mxu0 0.0
  %1312 = vmatpush1.msra.mxu0 %v1282
  %1313 = vmatprep.subr.mxu0 0.0
  %1314 = vmatpush1.msra.mxu0 %v1281
  %1315 = vmatprep.subr.mxu0 0.0
  %1316 = vmatpush1.msra.mxu0 %v1280
  %1317 = vmatprep.subr.mxu0 0.0
  %1318 = vmatpush1.msra.mxu0 %v1279
  %1319 = vmatprep.subr.mxu0 0.0
  %1320 = vmatpush1.msra.mxu0 %v1278
  %1321 = vmatprep.subr.mxu0 0.0
  %1322 = vmatpush1.msra.mxu0 %v1277
  %1323 = vmatprep.subr.mxu0 0.0
  %1324 = vmatpush1.msra.mxu0 %v1276
  %1325 = vmatprep.subr.mxu0 0.0
  %1326 = vmatpush2.msra.mxu0 0.0
  %1327 = vmatprep.subr.mxu0 0.0
  %1328 = vmatpush2.msra.mxu0 0.0
  %1329 = vmatprep.subr.mxu0 0.0
  %1330 = vmatpush2.msra.mxu0 0.0
  %1331 = vmatprep.subr.mxu0 0.0
  %1332 = vmatpush2.msra.mxu0 0.0
  %1333 = vmatprep.subr.mxu0 0.0
  %1334 = vmatpush2.msra.mxu0 0.0
  %1335 = vmatprep.subr.mxu0 0.0
  %1336 = vmatpush2.msra.mxu0 0.0
  %1337 = vmatprep.subr.mxu0 0.0
  %1338 = vmatpush2.msra.mxu0 0.0
  %1339 = vmatprep.subr.mxu0 0.0
  %1340 = vmatpush2.msra.mxu0 0.0
  %1341 = vmatprep.subr.mxu0 0.0
  %1342 = vmatpush2.msra.mxu0 0.0
  %1343 = vmatprep.subr.mxu0 0.0
  %1344 = vmatpush2.msra.mxu0 0.0
  %1345 = vmatprep.subr.mxu0 0.0
  %1346 = vmatpush2.msra.mxu0 0.0
  %1347 = vmatprep.subr.mxu0 0.0
  %1348 = vmatpush2.msra.mxu0 0.0
  %1349 = vmatprep.subr.mxu0 0.0
  %1350 = vmatpush2.msra.mxu0 0.0
  %1351 = vmatprep.subr.mxu0 0.0
  %1352 = vmatpush2.msra.mxu0 0.0
  %1353 = vmatprep.subr.mxu0 0.0
  %1354 = vmatpush2.msra.mxu0 0.0
  %1355 = vmatprep.subr.mxu0 0.0
  %1356 = vmatpush2.msra.mxu0 0.0
  %1357 = vmatprep.mubr.f32.mxu0 0.0
  %1358 = vmatmul.mubr.f32.gmra.mxu0 %v1291
  %v1359 = vpop.f32.mrf.mxu0
  %v1360 = vadd.f32 %v1289, %v1359
  %v1361 = vpop.f32.mrf.mxu0
  %1362 = vdwg.mxu0
  %v1363 = vtanh.pop %v1360
  %1364 = vst.msk [vmem:[%s10] sm:$0xff] %vm1259, %v1363
  // Predicated region
  $region38: #{encoder_forward.1} parent=0 // pred_check
    _
  $region39: #{encoder_forward.1} parent=0 // pred_check_branch
    %1366 = sbr.rel (0) target = $region41
  $region40: #{encoder_forward.1} parent=0 // pred_region
    _
  $region41: #{encoder_forward.1} parent=0 // pred_fallthru
    _
  // Predicated region
  $region42: #{encoder_forward.1} parent=0 // pred_check
    _
  $region43: #{encoder_forward.1} parent=0 // pred_check_branch
    %1368 = sbr.rel (0) target = $region45
  $region44: #{encoder_forward.1} parent=0 // pred_region
    _
  $region45: #{encoder_forward.1} parent=0 // pred_fallthru
    _
  // Predicated region
  $region46: #{encoder_forward.1} parent=0 // pred_check
    _
  $region47: #{encoder_forward.1} parent=0 // pred_check_branch
    %1370 = sbr.rel (0) target = $region49
  $region48: #{encoder_forward.1} parent=0 // pred_region
    _
  $region49: #{encoder_forward.1} parent=0 // pred_fallthru
    _
  // Predicated region
  $region50: #{encoder_forward.1} parent=0 // pred_check
    _
  $region51: #{encoder_forward.1} parent=0 // pred_check_branch
    %1372 = sbr.rel (0) target = $region53
  $region52: #{encoder_forward.1} parent=0 // pred_region
    _
  $region53: #{encoder_forward.1} parent=0 // pred_fallthru
    _

</llo_original>
